<compile_context>
chip_gen: v7x
topology: tpu7x:2x2x1
jax: 0.10.0
libtpu: 0.0.40
codegen_flags: <defaults>
</compile_context>

<pallas_src>
import jax
import jax.numpy as jnp
from jax.experimental import pallas as pl
from jax.experimental.pallas import tpu as pltpu


NUM_LAYER = 2


def _elu(x):
    # exp clamped at 0 so the untaken branch never produces inf.
    return jnp.where(x > 0, x, jnp.exp(jnp.minimum(x, 0.0)) - 1.0)


def _leaky_relu(x, slope=0.2):
    return jnp.where(x >= 0, x, slope * x)


def gat_kernel(
    nodes_ref,    # (Bc, N, I)   bf16
    edges_ref,    # (Bc, N, N)   bf16, single edge type (jj == 0)
    emb_w_ref,    # (I, H)       bf16
    wcat_ref,     # (L, H, H+2)  bf16, per layer [W | W@a1w | W@a2w]
    zbias_ref,    # (L, H+2)     f32, per layer [0 ... 0 | a1_b | a2_b]
    bias_h_ref,   # (L+1, H)     f32, [emb_b, state_bias_0, state_bias_1]
    head_w_ref,   # (H, OP)      bf16, [out_w | zeros | attf_w(last col)]
    head_b_ref,   # (1, OP)      f32,  [out_b | zeros | attf_b(last col)]
    out_ref,      # (1, Bc, OP)  f32
):
    Bc, N, I = nodes_ref.shape
    H = emb_w_ref.shape[1]
    OP = head_w_ref.shape[1]

    x = nodes_ref[...].reshape(Bc * N, I)                     # bf16 rows
    e = edges_ref[...].astype(jnp.float32)                    # (Bc, N, N)

    # state = embedding(nodes): one shared bf16 MXU dot for the whole chunk.
    state = (jnp.dot(x, emb_w_ref[...], preferred_element_type=jnp.float32)
             + bias_h_ref[0:1, :])                            # (Bc*N, H) f32

    for tt in range(NUM_LAYER):                               # unrolled: 2 layers, 1 head, 1 edgetype
        # Fused projection: one wide bf16 dot yields [Wh | Wh@a1w | Wh@a2w]
        # because the packed weight is [W | W@a1w | W@a2w].
        z = (jnp.dot(state.astype(jnp.bfloat16), wcat_ref[tt],
                     preferred_element_type=jnp.float32)
             + zbias_ref[tt:tt + 1, :])                       # (Bc*N, H+2) f32
        Wh = z[:, :H].reshape(Bc, N, H)                       # slice starts at lane 0
        att1 = z[:, H:H + 1].reshape(Bc, N, 1)
        att2 = z[:, H + 1:H + 2].reshape(Bc, N, 1)

        # att[b, i, k] = att1[b, i] + att2[b, k]; the swapaxes only touches
        # (Bc, N, 1) data — a single-vreg sublane->lane move per layer.
        att = att1 + jnp.swapaxes(att2, 1, 2)                 # (Bc, N, N)

        # softmax(leaky_relu(att) + edges, dim=1)  -> over source-node axis 1.
        att = _leaky_relu(att, 0.2) + e
        att = att - jnp.max(att, axis=1, keepdims=True)
        att = jnp.exp(att)
        att = att / jnp.sum(att, axis=1, keepdims=True)       # exact reciprocal (tiny)

        # msg[b, i, :] = sum_k att[b, i, k] * Wh[b, k, :]
        if N <= 32:
            # Per-graph (N x N) @ (N x H) matmuls would be MXU-launch-latency
            # bound at these sizes; do an unrolled VPU broadcast-MAC instead.
            msg = att[:, :, 0:1] * Wh[:, 0:1, :]
            for k in range(1, N):
                msg = msg + att[:, :, k:k + 1] * Wh[:, k:k + 1, :]
        else:
            msg = jnp.einsum("bik,bkh->bih",
                             att.astype(jnp.bfloat16), Wh.astype(jnp.bfloat16),
                             preferred_element_type=jnp.float32)

        state = msg.reshape(Bc * N, H) + bias_h_ref[tt + 1:tt + 2, :]
        if tt != NUM_LAYER - 1:
            state = _elu(state)                               # nonlin on hidden layers
        # last layer: mean over the single head == identity; else cat of 1 head == identity

    # Fused, lane-padded output head: one bf16 dot gives [out | 0...0 | gate_logit].
    hz = (jnp.dot(state.astype(jnp.bfloat16), head_w_ref[...],
                  preferred_element_type=jnp.float32)
          + head_b_ref[...])                                  # (Bc*N, OP) f32
    gate = jax.nn.sigmoid(hz[:, OP - 1:OP])                   # gate logit in the last lane
    # TODO(synk): optional `masks` multiply not wired in (module default masks=None).

    # graph-level pooling: mean over nodes of gate * out (padded cols stay 0;
    # the gate column itself is garbage and gets sliced away in the wrapper).
    out_ref[0] = jnp.mean((gate * hz).reshape(Bc, N, OP), axis=1)   # (Bc, OP)


def _pack_params(params, lane=128):
    """Pack the 20 module parameters into 6 fused, bf16-where-matmul arrays."""
    H = params["w0"].shape[0]
    O = params["out_w"].shape[1]
    OP = max(lane, -(-(O + 1) // lane) * lane)                # lane-dense head width

    def fuse_layer(W, a1w, a2w):
        # state @ [W | W@a1w | W@a2w] == [Wh | Wh@a1w | Wh@a2w]  (att nets act on Wh)
        return jnp.concatenate([W, W @ a1w, W @ a2w], axis=1)  # (H, H+2)

    wcat = jnp.stack([
        fuse_layer(params["w0"], params["a1w0"], params["a2w0"]),
        fuse_layer(params["w1"], params["a1w1"], params["a2w1"]),
    ], axis=0).astype(jnp.bfloat16)                           # (2, H, H+2)

    zeros_h = jnp.zeros((1, H), jnp.float32)
    zbias = jnp.concatenate([
        jnp.concatenate([zeros_h, params["a1b0"], params["a2b0"]], axis=1),
        jnp.concatenate([zeros_h, params["a1b1"], params["a2b1"]], axis=1),
    ], axis=0).astype(jnp.float32)                            # (2, H+2)

    bias_h = jnp.concatenate(
        [params["emb_b"], params["sb0"], params["sb1"]], axis=0
    ).astype(jnp.float32)                                     # (3, H)

    head_w = jnp.zeros((H, OP), jnp.float32)
    head_w = head_w.at[:, :O].set(params["out_w"]).at[:, OP - 1].set(params["attf_w"][:, 0])
    head_b = jnp.zeros((1, OP), jnp.float32)
    head_b = head_b.at[:, :O].set(params["out_b"]).at[:, OP - 1].set(params["attf_b"][:, 0])

    emb_w = params["emb_w"].astype(jnp.bfloat16)
    return emb_w, wcat, zbias, bias_h, head_w.astype(jnp.bfloat16), head_b, OP


def _choose_chunk(B, N, max_chunk=128):
    """Per-step batch chunk: as large as the O(N^2) VMEM budget allows (safe on
    v7x's 64 MiB / 32 MiB scoped VMEM), capped so the grid has >= 2 steps when
    B >= 2 so the "parallel" axis can shard across both v7x TensorCores."""
    budget = 12 * 2**20
    per_graph = N * N * (2 * 2 + 4 * 4)   # bf16 edges (double-buffered) + f32 att temps
    cap = max(1, budget // max(per_graph, 1))
    cap = min(cap, max_chunk, B)
    if B >= 2:
        cap = min(cap, B // 2)            # guarantee >= 2 grid steps for megacore
    cap = max(1, cap)
    bc = cap
    while B % bc:                         # largest divisor of B not above the cap
        bc -= 1
    return bc


def _vmem_limit_bytes(Bc, N, I, H, OP):
    """Conservative per-step VMEM estimate (double-buffered blocks + f32 temps)."""
    blocks = 2 * (Bc * N * I * 2 + Bc * N * N * 2 + Bc * OP * 4)
    weights = 2 * (I * H * 2 + NUM_LAYER * H * (H + 2) * 2 + NUM_LAYER * (H + 2) * 4
                   + (NUM_LAYER + 1) * H * 4 + H * OP * 2 + OP * 4)
    temps = Bc * N * N * 4 * 4 + Bc * N * H * 4 * 4 + Bc * N * OP * 4 * 2
    est = blocks + weights + temps
    return int(min(48 * 2**20, max(32 * 2**20, 2 * est)))


def gat_forward(nodes, edges, params, max_chunk=128):
    """nodes: (B, N, I), edges: (B, N, N) or (B, N, N, 1)  ->  (B, O) f32."""
    if edges.ndim == 4:
        # TODO(synk): only edge type 0 is supported (module default num_edgetype=1).
        edges = edges[..., 0]
    B, N, I = nodes.shape
    O = params["out_w"].shape[1]
    H = params["emb_w"].shape[1]

    # Stream nodes/edges as bf16 (edges are the dominant O(N^2) HBM traffic);
    # all accumulation stays f32 in-kernel.
    nodes = nodes.astype(jnp.bfloat16)
    edges = edges.astype(jnp.bfloat16)

    emb_w, wcat, zbias, bias_h, head_w, head_b, OP = _pack_params(params)
    Bc = _choose_chunk(B, N, max_chunk)
    num_chunks = B // Bc
    vmem_limit = _vmem_limit_bytes(Bc, N, I, H, OP)

    def full(shape):
        return pl.BlockSpec(shape, lambda b: (0,) * len(shape))

    out = pl.pallas_call(
        gat_kernel,
        out_shape=jax.ShapeDtypeStruct((num_chunks, Bc, OP), jnp.float32),
        grid_spec=pltpu.PrefetchScalarGridSpec(
            num_scalar_prefetch=0,
            grid=(num_chunks,),
            in_specs=[
                pl.BlockSpec((Bc, N, I), lambda b: (b, 0, 0)),   # nodes (bf16)
                pl.BlockSpec((Bc, N, N), lambda b: (b, 0, 0)),   # edges (bf16)
                full((I, H)),                                    # embedding W
                full((NUM_LAYER, H, H + 2)),                     # fused layer weights
                full((NUM_LAYER, H + 2)),                        # fused att biases
                full((NUM_LAYER + 1, H)),                        # emb_b + state biases
                full((H, OP)),                                   # lane-padded head W
                full((1, OP)),                                   # lane-padded head b
            ],
            out_specs=pl.BlockSpec((1, Bc, OP), lambda b: (b, 0, 0)),
        ),
        compiler_params=pltpu.CompilerParams(
            dimension_semantics=("parallel",),
            vmem_limit_bytes=vmem_limit),
    )(nodes, edges, emb_w, wcat, zbias, bias_h, head_w, head_b)

    return out.reshape(B, OP)[:, :O]                          # (B, O), output_level='graph'


def gat_reference(nodes, edges, params):
    """Pure-JAX f32 reference mirroring the PyTorch forward (sanity check)."""
    if edges.ndim == 4:
        edges = edges[..., 0]
    state = nodes @ params["emb_w"] + params["emb_b"]                   # (B,N,H)
    layer_params = [
        (params["w0"], params["a1w0"], params["a1b0"], params["a2w0"], params["a2b0"], params["sb0"]),
        (params["w1"], params["a1w1"], params["a1b1"], params["a2w1"], params["a2b1"], params["sb1"]),
    ]
    for tt, (W, a1w, a1b, a2w, a2b, sb) in enumerate(layer_params):
        Wh = state @ W                                                  # (B,N,H)
        att1 = Wh @ a1w + a1b                                           # (B,N,1)
        att2 = Wh @ a2w + a2b                                           # (B,N,1)
        att = att1 + jnp.swapaxes(att2, 1, 2)                           # (B,N,N)
        att = jnp.where(att >= 0, att, 0.2 * att) + edges
        att = jax.nn.softmax(att, axis=1)
        msg = jnp.einsum("bik,bkh->bih", att, Wh) + sb                  # (B,N,H)
        if tt != len(layer_params) - 1:
            msg = jnp.where(msg > 0, msg, jnp.exp(msg) - 1.0)
        state = msg
    out = state @ params["out_w"] + params["out_b"]                     # (B,N,O)
    gate = jax.nn.sigmoid(state @ params["attf_w"] + params["attf_b"])  # (B,N,1)
    return jnp.mean(gate * out, axis=1)                                 # (B,O)


def init_params(key, input_dim, hidden_dim, out_dim):
    ks = jax.random.split(key, 16)

    def lin(k, fan_in, fan_out):
        bound = 1.0 / jnp.sqrt(fan_in)
        return jax.random.uniform(k, (fan_in, fan_out), jnp.float32, -bound, bound)

    return {
        "emb_w": lin(ks[0], input_dim, hidden_dim),
        "emb_b": jax.random.uniform(ks[1], (1, hidden_dim), jnp.float32, -0.1, 0.1),
        "w0": lin(ks[2], hidden_dim, hidden_dim),
        "w1": lin(ks[3], hidden_dim, hidden_dim),
        "a1w0": lin(ks[4], hidden_dim, 1), "a1b0": jax.random.uniform(ks[5], (1, 1), jnp.float32, -0.1, 0.1),
        "a2w0": lin(ks[6], hidden_dim, 1), "a2b0": jax.random.uniform(ks[7], (1, 1), jnp.float32, -0.1, 0.1),
        "a1w1": lin(ks[8], hidden_dim, 1), "a1b1": jax.random.uniform(ks[9], (1, 1), jnp.float32, -0.1, 0.1),
        "a2w1": lin(ks[10], hidden_dim, 1), "a2b1": jax.random.uniform(ks[11], (1, 1), jnp.float32, -0.1, 0.1),
        "sb0": jnp.zeros((1, hidden_dim), jnp.float32),   # state_bias init to zeros (as in module)
        "sb1": jnp.zeros((1, hidden_dim), jnp.float32),
        "out_w": lin(ks[12], hidden_dim, out_dim),
        "out_b": jax.random.uniform(ks[13], (1, out_dim), jnp.float32, -0.1, 0.1),
        "attf_w": lin(ks[14], hidden_dim, 1),
        "attf_b": jax.random.uniform(ks[15], (1, 1), jnp.float32, -0.1, 0.1),
    }


if __name__ == "__main__":
    B, N, I, H, O = 2, 8, 12, 32, 4
    key = jax.random.PRNGKey(0)
    k_nodes, k_edges, k_params = jax.random.split(key, 3)

    nodes = jax.random.normal(k_nodes, (B, N, I), jnp.float32)
    edges = jax.random.normal(k_edges, (B, N, N, 1), jnp.float32) * 0.5
    params = init_params(k_params, I, H, O)

    out = gat_forward(nodes, edges, params)          # (B, O) graph-level output
    out = jax.block_until_ready(out)

    ref = jax.block_until_ready(gat_reference(nodes, edges, params))
    assert out.shape == (B, O)
    # Tolerance covers bf16 MXU operands and bf16-streamed nodes/edges
    # (f32 accumulation everywhere); structural errors are far above this.
    assert jnp.allclose(out, ref, rtol=2e-2, atol=2e-2), (out, ref)

    print("KERNEL_OK")
</pallas_src>

<mosaic_0001>
module attributes {stable_mosaic.version = 11 : i64} {
  func.func @gat_kernel(%arg0: i32, %arg1: memref<1x8x12xbf16, #tpu.memory_space<vmem>>, %arg2: memref<1x8x8xbf16, #tpu.memory_space<vmem>>, %arg3: memref<12x32xbf16, #tpu.memory_space<vmem>>, %arg4: memref<2x32x34xbf16, #tpu.memory_space<vmem>>, %arg5: memref<2x34xf32, #tpu.memory_space<vmem>>, %arg6: memref<3x32xf32, #tpu.memory_space<vmem>>, %arg7: memref<32x128xbf16, #tpu.memory_space<vmem>>, %arg8: memref<1x128xf32, #tpu.memory_space<vmem>>, %arg9: memref<1x1x128xf32, #tpu.memory_space<vmem>>) attributes {dimension_semantics = [#tpu.dimension_semantics<parallel>], iteration_bounds = array<i64: 2>, scalar_prefetch = 0 : i64, scratch_operands = 0 : i64, tpu.core_type = #tpu.core_type<tc>, window_params = [{transform_indices = @transform_0, window_bounds = array<i64: 1, 8, 12>}, {transform_indices = @transform_1, window_bounds = array<i64: 1, 8, 8>}, {pipeline_mode = #tpu.pipeline_mode<synchronous>, transform_indices = @transform_2, window_bounds = array<i64: 12, 32>}, {pipeline_mode = #tpu.pipeline_mode<synchronous>, transform_indices = @transform_3, window_bounds = array<i64: 2, 32, 34>}, {pipeline_mode = #tpu.pipeline_mode<synchronous>, transform_indices = @transform_4, window_bounds = array<i64: 2, 34>}, {pipeline_mode = #tpu.pipeline_mode<synchronous>, transform_indices = @transform_5, window_bounds = array<i64: 3, 32>}, {pipeline_mode = #tpu.pipeline_mode<synchronous>, transform_indices = @transform_6, window_bounds = array<i64: 32, 128>}, {pipeline_mode = #tpu.pipeline_mode<synchronous>, transform_indices = @transform_7, window_bounds = array<i64: 1, 128>}, {transform_indices = @transform_8, window_bounds = array<i64: 1, 1, 128>}]} {
    %c0 = arith.constant 0 : index
    %c0_0 = arith.constant 0 : index
    %c0_1 = arith.constant 0 : index
    %0 = vector.load %arg1[%c0, %c0_0, %c0_1] : memref<1x8x12xbf16, #tpu.memory_space<vmem>>, vector<1x8x12xbf16>
    %1 = vector.shape_cast %0 : vector<1x8x12xbf16> to vector<8x12xbf16>
    %c0_2 = arith.constant 0 : index
    %c0_3 = arith.constant 0 : index
    %c0_4 = arith.constant 0 : index
    %2 = vector.load %arg2[%c0_2, %c0_3, %c0_4] : memref<1x8x8xbf16, #tpu.memory_space<vmem>>, vector<1x8x8xbf16>
    %3 = arith.extf %2 : vector<1x8x8xbf16> to vector<1x8x8xf32>
    %c0_5 = arith.constant 0 : index
    %c0_6 = arith.constant 0 : index
    %4 = vector.load %arg3[%c0_5, %c0_6] : memref<12x32xbf16, #tpu.memory_space<vmem>>, vector<12x32xbf16>
    %cst = arith.constant dense<0.000000e+00> : vector<8x32xf32>
    %5 = tpu.matmul %1, %4, %cst {dimension_numbers = #tpu.dot_dimension_numbers<[1], [0], [0], [1], [0, 0, 1, 1], [], []>} : vector<8x12xbf16>, vector<12x32xbf16>, vector<8x32xf32> -> vector<8x32xf32>
    %c0_7 = arith.constant 0 : index
    %c0_8 = arith.constant 0 : index
    %6 = vector.load %arg6[%c0_7, %c0_8] : memref<3x32xf32, #tpu.memory_space<vmem>>, vector<1x32xf32>
    %7 = vector.broadcast %6 : vector<1x32xf32> to vector<8x32xf32>
    %8 = arith.addf %5, %7 : vector<8x32xf32>
    %9 = arith.truncf %8 : vector<8x32xf32> to vector<8x32xbf16>
    %c0_9 = arith.constant 0 : index
    %c0_10 = arith.constant 0 : index
    %c0_11 = arith.constant 0 : index
    %10 = vector.load %arg4[%c0_9, %c0_10, %c0_11] : memref<2x32x34xbf16, #tpu.memory_space<vmem>>, vector<1x32x34xbf16>
    %11 = vector.shape_cast %10 : vector<1x32x34xbf16> to vector<32x34xbf16>
    %cst_12 = arith.constant dense<0.000000e+00> : vector<8x34xf32>
    %12 = tpu.matmul %9, %11, %cst_12 {dimension_numbers = #tpu.dot_dimension_numbers<[1], [0], [0], [1], [0, 0, 1, 1], [], []>} : vector<8x32xbf16>, vector<32x34xbf16>, vector<8x34xf32> -> vector<8x34xf32>
    %c0_13 = arith.constant 0 : index
    %c0_14 = arith.constant 0 : index
    %13 = vector.load %arg5[%c0_13, %c0_14] : memref<2x34xf32, #tpu.memory_space<vmem>>, vector<1x34xf32>
    %14 = vector.broadcast %13 : vector<1x34xf32> to vector<8x34xf32>
    %15 = arith.addf %12, %14 : vector<8x34xf32>
    %16 = vector.extract_strided_slice %15 {offsets = [0, 0], sizes = [8, 32], strides = [1, 1]} : vector<8x34xf32> to vector<8x32xf32>
    %17 = vector.shape_cast %16 : vector<8x32xf32> to vector<1x8x32xf32>
    %18 = vector.extract_strided_slice %15 {offsets = [0, 32], sizes = [8, 1], strides = [1, 1]} : vector<8x34xf32> to vector<8x1xf32>
    %19 = vector.shape_cast %18 : vector<8x1xf32> to vector<1x8x1xf32>
    %20 = vector.extract_strided_slice %15 {offsets = [0, 33], sizes = [8, 1], strides = [1, 1]} : vector<8x34xf32> to vector<8x1xf32>
    %21 = vector.shape_cast %20 : vector<8x1xf32> to vector<1x8x1xf32>
    %22 = tpu.transpose %21, [0, 2, 1] : vector<1x8x1xf32> -> vector<1x1x8xf32>
    %23 = vector.broadcast %19 : vector<1x8x1xf32> to vector<1x8x8xf32>
    %24 = vector.broadcast %22 : vector<1x1x8xf32> to vector<1x8x8xf32>
    %25 = arith.addf %23, %24 : vector<1x8x8xf32>
    %cst_15 = arith.constant 0.000000e+00 : f32
    %26 = vector.broadcast %cst_15 : f32 to vector<1x8x8xf32>
    %27 = arith.cmpf oge, %25, %26 : vector<1x8x8xf32>
    %cst_16 = arith.constant 2.000000e-01 : f32
    %28 = vector.broadcast %cst_16 : f32 to vector<1x8x8xf32>
    %29 = arith.mulf %28, %25 : vector<1x8x8xf32>
    %30 = arith.select %27, %25, %29 : vector<1x8x8xi1>, vector<1x8x8xf32>
    %31 = arith.addf %30, %3 : vector<1x8x8xf32>
    %cst_17 = arith.constant dense<0xFF800000> : vector<1x8xf32>
    %32 = vector.multi_reduction <maximumf>, %31, %cst_17 [1] : vector<1x8x8xf32> to vector<1x8xf32>
    %33 = vector.shape_cast %32 : vector<1x8xf32> to vector<1x1x8xf32>
    %34 = vector.broadcast %33 : vector<1x1x8xf32> to vector<1x8x8xf32>
    %35 = arith.subf %31, %34 : vector<1x8x8xf32>
    %36 = math.exp %35 : vector<1x8x8xf32>
    %cst_18 = arith.constant dense<0.000000e+00> : vector<1x8xf32>
    %37 = vector.multi_reduction <add>, %36, %cst_18 [1] : vector<1x8x8xf32> to vector<1x8xf32>
    %38 = vector.shape_cast %37 : vector<1x8xf32> to vector<1x1x8xf32>
    %39 = vector.broadcast %38 : vector<1x1x8xf32> to vector<1x8x8xf32>
    %40 = arith.divf %36, %39 : vector<1x8x8xf32>
    %41 = vector.extract_strided_slice %40 {offsets = [0, 0, 0], sizes = [1, 8, 1], strides = [1, 1, 1]} : vector<1x8x8xf32> to vector<1x8x1xf32>
    %42 = vector.extract_strided_slice %17 {offsets = [0, 0, 0], sizes = [1, 1, 32], strides = [1, 1, 1]} : vector<1x8x32xf32> to vector<1x1x32xf32>
    %43 = vector.broadcast %41 : vector<1x8x1xf32> to vector<1x8x32xf32>
    %44 = vector.broadcast %42 : vector<1x1x32xf32> to vector<1x8x32xf32>
    %45 = arith.mulf %43, %44 : vector<1x8x32xf32>
    %46 = vector.extract_strided_slice %40 {offsets = [0, 0, 1], sizes = [1, 8, 1], strides = [1, 1, 1]} : vector<1x8x8xf32> to vector<1x8x1xf32>
    %47 = vector.extract_strided_slice %17 {offsets = [0, 1, 0], sizes = [1, 1, 32], strides = [1, 1, 1]} : vector<1x8x32xf32> to vector<1x1x32xf32>
    %48 = vector.broadcast %46 : vector<1x8x1xf32> to vector<1x8x32xf32>
    %49 = vector.broadcast %47 : vector<1x1x32xf32> to vector<1x8x32xf32>
    %50 = arith.mulf %48, %49 : vector<1x8x32xf32>
    %51 = arith.addf %45, %50 : vector<1x8x32xf32>
    %52 = vector.extract_strided_slice %40 {offsets = [0, 0, 2], sizes = [1, 8, 1], strides = [1, 1, 1]} : vector<1x8x8xf32> to vector<1x8x1xf32>
    %53 = vector.extract_strided_slice %17 {offsets = [0, 2, 0], sizes = [1, 1, 32], strides = [1, 1, 1]} : vector<1x8x32xf32> to vector<1x1x32xf32>
    %54 = vector.broadcast %52 : vector<1x8x1xf32> to vector<1x8x32xf32>
    %55 = vector.broadcast %53 : vector<1x1x32xf32> to vector<1x8x32xf32>
    %56 = arith.mulf %54, %55 : vector<1x8x32xf32>
    %57 = arith.addf %51, %56 : vector<1x8x32xf32>
    %58 = vector.extract_strided_slice %40 {offsets = [0, 0, 3], sizes = [1, 8, 1], strides = [1, 1, 1]} : vector<1x8x8xf32> to vector<1x8x1xf32>
    %59 = vector.extract_strided_slice %17 {offsets = [0, 3, 0], sizes = [1, 1, 32], strides = [1, 1, 1]} : vector<1x8x32xf32> to vector<1x1x32xf32>
    %60 = vector.broadcast %58 : vector<1x8x1xf32> to vector<1x8x32xf32>
    %61 = vector.broadcast %59 : vector<1x1x32xf32> to vector<1x8x32xf32>
    %62 = arith.mulf %60, %61 : vector<1x8x32xf32>
    %63 = arith.addf %57, %62 : vector<1x8x32xf32>
    %64 = vector.extract_strided_slice %40 {offsets = [0, 0, 4], sizes = [1, 8, 1], strides = [1, 1, 1]} : vector<1x8x8xf32> to vector<1x8x1xf32>
    %65 = vector.extract_strided_slice %17 {offsets = [0, 4, 0], sizes = [1, 1, 32], strides = [1, 1, 1]} : vector<1x8x32xf32> to vector<1x1x32xf32>
    %66 = vector.broadcast %64 : vector<1x8x1xf32> to vector<1x8x32xf32>
    %67 = vector.broadcast %65 : vector<1x1x32xf32> to vector<1x8x32xf32>
    %68 = arith.mulf %66, %67 : vector<1x8x32xf32>
    %69 = arith.addf %63, %68 : vector<1x8x32xf32>
    %70 = vector.extract_strided_slice %40 {offsets = [0, 0, 5], sizes = [1, 8, 1], strides = [1, 1, 1]} : vector<1x8x8xf32> to vector<1x8x1xf32>
    %71 = vector.extract_strided_slice %17 {offsets = [0, 5, 0], sizes = [1, 1, 32], strides = [1, 1, 1]} : vector<1x8x32xf32> to vector<1x1x32xf32>
    %72 = vector.broadcast %70 : vector<1x8x1xf32> to vector<1x8x32xf32>
    %73 = vector.broadcast %71 : vector<1x1x32xf32> to vector<1x8x32xf32>
    %74 = arith.mulf %72, %73 : vector<1x8x32xf32>
    %75 = arith.addf %69, %74 : vector<1x8x32xf32>
    %76 = vector.extract_strided_slice %40 {offsets = [0, 0, 6], sizes = [1, 8, 1], strides = [1, 1, 1]} : vector<1x8x8xf32> to vector<1x8x1xf32>
    %77 = vector.extract_strided_slice %17 {offsets = [0, 6, 0], sizes = [1, 1, 32], strides = [1, 1, 1]} : vector<1x8x32xf32> to vector<1x1x32xf32>
    %78 = vector.broadcast %76 : vector<1x8x1xf32> to vector<1x8x32xf32>
    %79 = vector.broadcast %77 : vector<1x1x32xf32> to vector<1x8x32xf32>
    %80 = arith.mulf %78, %79 : vector<1x8x32xf32>
    %81 = arith.addf %75, %80 : vector<1x8x32xf32>
    %82 = vector.extract_strided_slice %40 {offsets = [0, 0, 7], sizes = [1, 8, 1], strides = [1, 1, 1]} : vector<1x8x8xf32> to vector<1x8x1xf32>
    %83 = vector.extract_strided_slice %17 {offsets = [0, 7, 0], sizes = [1, 1, 32], strides = [1, 1, 1]} : vector<1x8x32xf32> to vector<1x1x32xf32>
    %84 = vector.broadcast %82 : vector<1x8x1xf32> to vector<1x8x32xf32>
    %85 = vector.broadcast %83 : vector<1x1x32xf32> to vector<1x8x32xf32>
    %86 = arith.mulf %84, %85 : vector<1x8x32xf32>
    %87 = arith.addf %81, %86 : vector<1x8x32xf32>
    %88 = vector.shape_cast %87 : vector<1x8x32xf32> to vector<8x32xf32>
    %c1 = arith.constant 1 : index
    %c0_19 = arith.constant 0 : index
    %89 = vector.load %arg6[%c1, %c0_19] : memref<3x32xf32, #tpu.memory_space<vmem>>, vector<1x32xf32>
    %90 = vector.broadcast %89 : vector<1x32xf32> to vector<8x32xf32>
    %91 = arith.addf %88, %90 : vector<8x32xf32>
    %cst_20 = arith.constant 0.000000e+00 : f32
    %92 = vector.broadcast %cst_20 : f32 to vector<8x32xf32>
    %93 = arith.cmpf ogt, %91, %92 : vector<8x32xf32>
    %cst_21 = arith.constant 0.000000e+00 : f32
    %94 = vector.broadcast %cst_21 : f32 to vector<8x32xf32>
    %95 = arith.minimumf %91, %94 : vector<8x32xf32>
    %96 = math.exp %95 : vector<8x32xf32>
    %cst_22 = arith.constant 1.000000e+00 : f32
    %97 = vector.broadcast %cst_22 : f32 to vector<8x32xf32>
    %98 = arith.subf %96, %97 : vector<8x32xf32>
    %99 = arith.select %93, %91, %98 : vector<8x32xi1>, vector<8x32xf32>
    %100 = arith.truncf %99 : vector<8x32xf32> to vector<8x32xbf16>
    %c1_23 = arith.constant 1 : index
    %c0_24 = arith.constant 0 : index
    %c0_25 = arith.constant 0 : index
    %101 = vector.load %arg4[%c1_23, %c0_24, %c0_25] : memref<2x32x34xbf16, #tpu.memory_space<vmem>>, vector<1x32x34xbf16>
    %102 = vector.shape_cast %101 : vector<1x32x34xbf16> to vector<32x34xbf16>
    %cst_26 = arith.constant dense<0.000000e+00> : vector<8x34xf32>
    %103 = tpu.matmul %100, %102, %cst_26 {dimension_numbers = #tpu.dot_dimension_numbers<[1], [0], [0], [1], [0, 0, 1, 1], [], []>} : vector<8x32xbf16>, vector<32x34xbf16>, vector<8x34xf32> -> vector<8x34xf32>
    %c1_27 = arith.constant 1 : index
    %c0_28 = arith.constant 0 : index
    %104 = vector.load %arg5[%c1_27, %c0_28] : memref<2x34xf32, #tpu.memory_space<vmem>>, vector<1x34xf32>
    %105 = vector.broadcast %104 : vector<1x34xf32> to vector<8x34xf32>
    %106 = arith.addf %103, %105 : vector<8x34xf32>
    %107 = vector.extract_strided_slice %106 {offsets = [0, 0], sizes = [8, 32], strides = [1, 1]} : vector<8x34xf32> to vector<8x32xf32>
    %108 = vector.shape_cast %107 : vector<8x32xf32> to vector<1x8x32xf32>
    %109 = vector.extract_strided_slice %106 {offsets = [0, 32], sizes = [8, 1], strides = [1, 1]} : vector<8x34xf32> to vector<8x1xf32>
    %110 = vector.shape_cast %109 : vector<8x1xf32> to vector<1x8x1xf32>
    %111 = vector.extract_strided_slice %106 {offsets = [0, 33], sizes = [8, 1], strides = [1, 1]} : vector<8x34xf32> to vector<8x1xf32>
    %112 = vector.shape_cast %111 : vector<8x1xf32> to vector<1x8x1xf32>
    %113 = tpu.transpose %112, [0, 2, 1] : vector<1x8x1xf32> -> vector<1x1x8xf32>
    %114 = vector.broadcast %110 : vector<1x8x1xf32> to vector<1x8x8xf32>
    %115 = vector.broadcast %113 : vector<1x1x8xf32> to vector<1x8x8xf32>
    %116 = arith.addf %114, %115 : vector<1x8x8xf32>
    %cst_29 = arith.constant 0.000000e+00 : f32
    %117 = vector.broadcast %cst_29 : f32 to vector<1x8x8xf32>
    %118 = arith.cmpf oge, %116, %117 : vector<1x8x8xf32>
    %cst_30 = arith.constant 2.000000e-01 : f32
    %119 = vector.broadcast %cst_30 : f32 to vector<1x8x8xf32>
    %120 = arith.mulf %119, %116 : vector<1x8x8xf32>
    %121 = arith.select %118, %116, %120 : vector<1x8x8xi1>, vector<1x8x8xf32>
    %122 = arith.addf %121, %3 : vector<1x8x8xf32>
    %cst_31 = arith.constant dense<0xFF800000> : vector<1x8xf32>
    %123 = vector.multi_reduction <maximumf>, %122, %cst_31 [1] : vector<1x8x8xf32> to vector<1x8xf32>
    %124 = vector.shape_cast %123 : vector<1x8xf32> to vector<1x1x8xf32>
    %125 = vector.broadcast %124 : vector<1x1x8xf32> to vector<1x8x8xf32>
    %126 = arith.subf %122, %125 : vector<1x8x8xf32>
    %127 = math.exp %126 : vector<1x8x8xf32>
    %cst_32 = arith.constant dense<0.000000e+00> : vector<1x8xf32>
    %128 = vector.multi_reduction <add>, %127, %cst_32 [1] : vector<1x8x8xf32> to vector<1x8xf32>
    %129 = vector.shape_cast %128 : vector<1x8xf32> to vector<1x1x8xf32>
    %130 = vector.broadcast %129 : vector<1x1x8xf32> to vector<1x8x8xf32>
    %131 = arith.divf %127, %130 : vector<1x8x8xf32>
    %132 = vector.extract_strided_slice %131 {offsets = [0, 0, 0], sizes = [1, 8, 1], strides = [1, 1, 1]} : vector<1x8x8xf32> to vector<1x8x1xf32>
    %133 = vector.extract_strided_slice %108 {offsets = [0, 0, 0], sizes = [1, 1, 32], strides = [1, 1, 1]} : vector<1x8x32xf32> to vector<1x1x32xf32>
    %134 = vector.broadcast %132 : vector<1x8x1xf32> to vector<1x8x32xf32>
    %135 = vector.broadcast %133 : vector<1x1x32xf32> to vector<1x8x32xf32>
    %136 = arith.mulf %134, %135 : vector<1x8x32xf32>
    %137 = vector.extract_strided_slice %131 {offsets = [0, 0, 1], sizes = [1, 8, 1], strides = [1, 1, 1]} : vector<1x8x8xf32> to vector<1x8x1xf32>
    %138 = vector.extract_strided_slice %108 {offsets = [0, 1, 0], sizes = [1, 1, 32], strides = [1, 1, 1]} : vector<1x8x32xf32> to vector<1x1x32xf32>
    %139 = vector.broadcast %137 : vector<1x8x1xf32> to vector<1x8x32xf32>
    %140 = vector.broadcast %138 : vector<1x1x32xf32> to vector<1x8x32xf32>
    %141 = arith.mulf %139, %140 : vector<1x8x32xf32>
    %142 = arith.addf %136, %141 : vector<1x8x32xf32>
    %143 = vector.extract_strided_slice %131 {offsets = [0, 0, 2], sizes = [1, 8, 1], strides = [1, 1, 1]} : vector<1x8x8xf32> to vector<1x8x1xf32>
    %144 = vector.extract_strided_slice %108 {offsets = [0, 2, 0], sizes = [1, 1, 32], strides = [1, 1, 1]} : vector<1x8x32xf32> to vector<1x1x32xf32>
    %145 = vector.broadcast %143 : vector<1x8x1xf32> to vector<1x8x32xf32>
    %146 = vector.broadcast %144 : vector<1x1x32xf32> to vector<1x8x32xf32>
    %147 = arith.mulf %145, %146 : vector<1x8x32xf32>
    %148 = arith.addf %142, %147 : vector<1x8x32xf32>
    %149 = vector.extract_strided_slice %131 {offsets = [0, 0, 3], sizes = [1, 8, 1], strides = [1, 1, 1]} : vector<1x8x8xf32> to vector<1x8x1xf32>
    %150 = vector.extract_strided_slice %108 {offsets = [0, 3, 0], sizes = [1, 1, 32], strides = [1, 1, 1]} : vector<1x8x32xf32> to vector<1x1x32xf32>
    %151 = vector.broadcast %149 : vector<1x8x1xf32> to vector<1x8x32xf32>
    %152 = vector.broadcast %150 : vector<1x1x32xf32> to vector<1x8x32xf32>
    %153 = arith.mulf %151, %152 : vector<1x8x32xf32>
    %154 = arith.addf %148, %153 : vector<1x8x32xf32>
    %155 = vector.extract_strided_slice %131 {offsets = [0, 0, 4], sizes = [1, 8, 1], strides = [1, 1, 1]} : vector<1x8x8xf32> to vector<1x8x1xf32>
    %156 = vector.extract_strided_slice %108 {offsets = [0, 4, 0], sizes = [1, 1, 32], strides = [1, 1, 1]} : vector<1x8x32xf32> to vector<1x1x32xf32>
    %157 = vector.broadcast %155 : vector<1x8x1xf32> to vector<1x8x32xf32>
    %158 = vector.broadcast %156 : vector<1x1x32xf32> to vector<1x8x32xf32>
    %159 = arith.mulf %157, %158 : vector<1x8x32xf32>
    %160 = arith.addf %154, %159 : vector<1x8x32xf32>
    %161 = vector.extract_strided_slice %131 {offsets = [0, 0, 5], sizes = [1, 8, 1], strides = [1, 1, 1]} : vector<1x8x8xf32> to vector<1x8x1xf32>
    %162 = vector.extract_strided_slice %108 {offsets = [0, 5, 0], sizes = [1, 1, 32], strides = [1, 1, 1]} : vector<1x8x32xf32> to vector<1x1x32xf32>
    %163 = vector.broadcast %161 : vector<1x8x1xf32> to vector<1x8x32xf32>
    %164 = vector.broadcast %162 : vector<1x1x32xf32> to vector<1x8x32xf32>
    %165 = arith.mulf %163, %164 : vector<1x8x32xf32>
    %166 = arith.addf %160, %165 : vector<1x8x32xf32>
    %167 = vector.extract_strided_slice %131 {offsets = [0, 0, 6], sizes = [1, 8, 1], strides = [1, 1, 1]} : vector<1x8x8xf32> to vector<1x8x1xf32>
    %168 = vector.extract_strided_slice %108 {offsets = [0, 6, 0], sizes = [1, 1, 32], strides = [1, 1, 1]} : vector<1x8x32xf32> to vector<1x1x32xf32>
    %169 = vector.broadcast %167 : vector<1x8x1xf32> to vector<1x8x32xf32>
    %170 = vector.broadcast %168 : vector<1x1x32xf32> to vector<1x8x32xf32>
    %171 = arith.mulf %169, %170 : vector<1x8x32xf32>
    %172 = arith.addf %166, %171 : vector<1x8x32xf32>
    %173 = vector.extract_strided_slice %131 {offsets = [0, 0, 7], sizes = [1, 8, 1], strides = [1, 1, 1]} : vector<1x8x8xf32> to vector<1x8x1xf32>
    %174 = vector.extract_strided_slice %108 {offsets = [0, 7, 0], sizes = [1, 1, 32], strides = [1, 1, 1]} : vector<1x8x32xf32> to vector<1x1x32xf32>
    %175 = vector.broadcast %173 : vector<1x8x1xf32> to vector<1x8x32xf32>
    %176 = vector.broadcast %174 : vector<1x1x32xf32> to vector<1x8x32xf32>
    %177 = arith.mulf %175, %176 : vector<1x8x32xf32>
    %178 = arith.addf %172, %177 : vector<1x8x32xf32>
    %179 = vector.shape_cast %178 : vector<1x8x32xf32> to vector<8x32xf32>
    %c2 = arith.constant 2 : index
    %c0_33 = arith.constant 0 : index
    %180 = vector.load %arg6[%c2, %c0_33] : memref<3x32xf32, #tpu.memory_space<vmem>>, vector<1x32xf32>
    %181 = vector.broadcast %180 : vector<1x32xf32> to vector<8x32xf32>
    %182 = arith.addf %179, %181 : vector<8x32xf32>
    %183 = arith.truncf %182 : vector<8x32xf32> to vector<8x32xbf16>
    %c0_34 = arith.constant 0 : index
    %c0_35 = arith.constant 0 : index
    %184 = vector.load %arg7[%c0_34, %c0_35] : memref<32x128xbf16, #tpu.memory_space<vmem>>, vector<32x128xbf16>
    %cst_36 = arith.constant dense<0.000000e+00> : vector<8x128xf32>
    %185 = tpu.matmul %183, %184, %cst_36 {dimension_numbers = #tpu.dot_dimension_numbers<[1], [0], [0], [1], [0, 0, 1, 1], [], []>} : vector<8x32xbf16>, vector<32x128xbf16>, vector<8x128xf32> -> vector<8x128xf32>
    %c0_37 = arith.constant 0 : index
    %c0_38 = arith.constant 0 : index
    %186 = vector.load %arg8[%c0_37, %c0_38] : memref<1x128xf32, #tpu.memory_space<vmem>>, vector<1x128xf32>
    %187 = vector.broadcast %186 : vector<1x128xf32> to vector<8x128xf32>
    %188 = arith.addf %185, %187 : vector<8x128xf32>
    %189 = vector.extract_strided_slice %188 {offsets = [0, 127], sizes = [8, 1], strides = [1, 1]} : vector<8x128xf32> to vector<8x1xf32>
    %190 = arith.negf %189 : vector<8x1xf32>
    %191 = math.exp %190 : vector<8x1xf32>
    %cst_39 = arith.constant 1.000000e+00 : f32
    %192 = vector.broadcast %cst_39 : f32 to vector<8x1xf32>
    %193 = arith.addf %192, %191 : vector<8x1xf32>
    %194 = arith.divf %192, %193 : vector<8x1xf32>
    %195 = vector.broadcast %194 : vector<8x1xf32> to vector<8x128xf32>
    %196 = arith.mulf %195, %188 : vector<8x128xf32>
    %197 = vector.shape_cast %196 : vector<8x128xf32> to vector<1x8x128xf32>
    %cst_40 = arith.constant dense<0.000000e+00> : vector<1x128xf32>
    %198 = vector.multi_reduction <add>, %197, %cst_40 [1] : vector<1x8x128xf32> to vector<1x128xf32>
    %cst_41 = arith.constant 8.000000e+00 : f32
    %199 = vector.broadcast %cst_41 : f32 to vector<1x128xf32>
    %200 = arith.divf %198, %199 : vector<1x128xf32>
    %c0_42 = arith.constant 0 : index
    %c0_43 = arith.constant 0 : index
    %c0_44 = arith.constant 0 : index
    %201 = vector.load %arg9[%c0_42, %c0_43, %c0_44] : memref<1x1x128xf32, #tpu.memory_space<vmem>>, vector<1x1x128xf32>
    %202 = vector.shape_cast %201 : vector<1x1x128xf32> to vector<1x128xf32>
    %203 = vector.shape_cast %200 : vector<1x128xf32> to vector<1x1x128xf32>
    tpu.vector_store %arg9[%c0_42, %c0_43, %c0_44], %203 {strides = array<i32>} : memref<1x1x128xf32, #tpu.memory_space<vmem>>, vector<1x1x128xf32>,
    return
  }
  func.func @transform_0(%arg0: i32) -> (i32, i32, i32) {
    %c0_i32 = arith.constant 0 : i32
    %c0_i32_0 = arith.constant 0 : i32
    %c0_i32_1 = arith.constant 0 : i32
    return %arg0, %c0_i32, %c0_i32_0 : i32, i32, i32
  }
  func.func @transform_1(%arg0: i32) -> (i32, i32, i32) {
    %c0_i32 = arith.constant 0 : i32
    %c0_i32_0 = arith.constant 0 : i32
    %c0_i32_1 = arith.constant 0 : i32
    return %arg0, %c0_i32, %c0_i32_0 : i32, i32, i32
  }
  func.func @transform_2(%arg0: i32) -> (i32, i32) {
    %c0_i32 = arith.constant 0 : i32
    %c0_i32_0 = arith.constant 0 : i32
    %c0_i32_1 = arith.constant 0 : i32
    return %c0_i32, %c0_i32_0 : i32, i32
  }
  func.func @transform_3(%arg0: i32) -> (i32, i32, i32) {
    %c0_i32 = arith.constant 0 : i32
    %c0_i32_0 = arith.constant 0 : i32
    %c0_i32_1 = arith.constant 0 : i32
    %c0_i32_2 = arith.constant 0 : i32
    return %c0_i32, %c0_i32_0, %c0_i32_1 : i32, i32, i32
  }
  func.func @transform_4(%arg0: i32) -> (i32, i32) {
    %c0_i32 = arith.constant 0 : i32
    %c0_i32_0 = arith.constant 0 : i32
    %c0_i32_1 = arith.constant 0 : i32
    return %c0_i32, %c0_i32_0 : i32, i32
  }
  func.func @transform_5(%arg0: i32) -> (i32, i32) {
    %c0_i32 = arith.constant 0 : i32
    %c0_i32_0 = arith.constant 0 : i32
    %c0_i32_1 = arith.constant 0 : i32
    return %c0_i32, %c0_i32_0 : i32, i32
  }
  func.func @transform_6(%arg0: i32) -> (i32, i32) {
    %c0_i32 = arith.constant 0 : i32
    %c0_i32_0 = arith.constant 0 : i32
    %c0_i32_1 = arith.constant 0 : i32
    return %c0_i32, %c0_i32_0 : i32, i32
  }
  func.func @transform_7(%arg0: i32) -> (i32, i32) {
    %c0_i32 = arith.constant 0 : i32
    %c0_i32_0 = arith.constant 0 : i32
    %c0_i32_1 = arith.constant 0 : i32
    return %c0_i32, %c0_i32_0 : i32, i32
  }
  func.func @transform_8(%arg0: i32) -> (i32, i32, i32) {
    %c0_i32 = arith.constant 0 : i32
    %c0_i32_0 = arith.constant 0 : i32
    %c0_i32_1 = arith.constant 0 : i32
    return %arg0, %c0_i32, %c0_i32_0 : i32, i32, i32
  }
}

</mosaic_0001>

<llo_original>
// kernel: tpu_custom_call.1
$region0: #{tpu_custom_call.1}
  #allocation0 [shape = 'u32[]', space=smem, size = 0x4, offset = 0x4, fixed_abs, tag = 'smem constant byte address 0x4 - core index']
  #allocation1 [shape = 'u32[144,128]{1,0:T(1,128)}', space=vmem, size = 0x12000, scoped, tag = 'internal scratch']
  %s0 = inlined_call_operand.hbm [shape: bf16[2,8,12], index: 0, kind: input, shape index: {}]
  %s1 = inlined_call_operand.hbm [shape: bf16[2,8,8], index: 1, kind: input, shape index: {}]
  %s2 = inlined_call_operand.hbm [shape: bf16[12,32], index: 2, kind: input, shape index: {}]
  %s3 = inlined_call_operand.hbm [shape: bf16[2,32,34], index: 3, kind: input, shape index: {}]
  %s4 = inlined_call_operand.vmem [shape: f32[2,34], index: 4, kind: input, shape index: {}]
  %s5 = inlined_call_operand.vmem [shape: f32[3,32], index: 5, kind: input, shape index: {}]
  %s6 = inlined_call_operand.vmem [shape: bf16[32,128], index: 6, kind: input, shape index: {}]
  %s7 = inlined_call_operand.vmem [shape: f32[1,128], index: 7, kind: input, shape index: {}]
  %s8 = inlined_call_operand.hbm [shape: f32[2,1,128], index: 8, kind: output, shape index: {}]
  %s9 = sld [smem:[#allocation0]]
  $region81: #{tpu_custom_call.1} parent=0
    _
  %s11 = ssub.s32 1, %s9
  %s12 = scalar_select 0, %s11, %s9
  $region1: #{tpu_custom_call.1} parent=0
    #allocation2 [shape = 'u8[4096]{0}', space=vmem, size = 0x1000, scoped, tag = 'input window, operand 0']
    #allocation3 [shape = 's32[2]{0}', space=sflag, size = 0x8, scoped, tag = 'scoped memory for tpu_custom_call.1']
    #allocation4 [shape = 's32[2]{0}', space=sflag, size = 0x8, scoped, tag = 'scoped memory for tpu_custom_call.1']
    #allocation5 [shape = 'u8[4096]{0}', space=vmem, size = 0x1000, scoped, tag = 'input window, operand 1']
    #allocation6 [shape = 's32[2]{0}', space=sflag, size = 0x8, scoped, tag = 'scoped memory for tpu_custom_call.1']
    #allocation7 [shape = 'u8[4096]{0}', space=vmem, size = 0x1000, scoped, tag = 'input window, operand 2, single buffered']
    #allocation8 [shape = 'u8[16384]{0}', space=vmem, size = 0x4000, scoped, tag = 'input window, operand 3, single buffered']
    #allocation9 [shape = 's32[1]{0}', space=sflag, size = 0x4, scoped, tag = 'scoped memory for tpu_custom_call.1']
    #allocation10 [shape = 'u8[1024]{0}', space=vmem, size = 0x400, scoped, tag = 'output window, operand 0']
    %13 = vsyncpa [#allocation3], 0
    %s14 = scalar_lea.sflag [#allocation3], 1
    %15 = vsyncpa %s14, 0
    %16 = vsyncpa [#allocation6], 0
    %s17 = scalar_lea.sflag [#allocation6], 1
    %18 = vsyncpa %s17, 0
    %19 = vsyncpa [#allocation9], 0
    %20 = vsyncpa [#allocation4], 0
    %s21 = scalar_lea.sflag [#allocation4], 1
    %22 = vsyncpa %s21, 0
    loop: start=0, step=1, limit=4
    $region2: #{tpu_custom_call.1} parent=1 // loop_pre_header
      _
    $region3: #{tpu_custom_call.1} parent=1 // loop_header
      %s24 = sphi 0, %s28
      %p25 = scmp.ge.s32.totalorder %s24, 4
      %s34 = sphi 0, %s36
      %s37 = sphi 0, %s34
      %s38 = sphi 0, %s37
      %s54 = sphi 0, %s38
      %s60 = sphi 0, %s62
      %s63 = sphi 0, %s60
      %s64 = sphi 0, %s63
      %s80 = sphi 0, %s64
      %s84 = sphi 0, %s84
      %s86 = sphi 0, %s84
      %s87 = sphi 0, %s86
      %s101 = sphi 0, %s87
      %s105 = sphi 0, %s105
      %s107 = sphi 0, %s105
      %s108 = sphi 0, %s107
      %s122 = sphi 0, %s108
      %s126 = sphi 0, %s126
      %s128 = sphi 0, %s126
      %s129 = sphi 0, %s128
      %s143 = sphi 0, %s129
      %s147 = sphi 0, %s147
      %s149 = sphi 0, %s147
      %s150 = sphi 0, %s149
      %s164 = sphi 0, %s150
      %s168 = sphi 0, %s168
      %s170 = sphi 0, %s168
      %s171 = sphi 0, %s170
      %s185 = sphi 0, %s171
      %s189 = sphi 0, %s189
      %s191 = sphi 0, %s189
      %s192 = sphi 0, %s191
      %s206 = sphi 0, %s192
      %s212 = sphi 0, %s214
      %s215 = sphi 0, %s212
      %s216 = sphi 0, %s215
      %s232 = sphi 0, %s216
    $region4: #{tpu_custom_call.1} parent=1 // loop_header_branch
      %27 = sbr.rel (%p25) target = $region8
    $region5: #{tpu_custom_call.1} parent=1 // loop_body
      %s29 = ssub.s32 %s24, 1
      %s30 = ssub.s32 %s24, 2
      %s31 = sadd.s32 %s24, 1
      %s32 = ssub.s32 %s24, %s31
      %p33 = scmp.eq.s32.totalorder %s32, 0
      %s35 = sadd.s32 %s34, 1
      %s36 = scalar_select %p33, %s34, %s35
      %p39 = pneg %p33
      %p40 = scmp.eq.s32.totalorder %s24, 1
      %p41 = por %p39, %p40
      %p42 = scmp.ne.s32.totalorder %s34, %s37
      %p43 = scmp.eq.s32.totalorder %s24, 0
      %p44 = por %p42, %p43
      %p45 = scmp.ne.s32.totalorder %s34, %s37
      %p46 = scmp.eq.s32.totalorder %s29, 1
      %p47 = por %p45, %p46
      %p48 = scmp.ne.s32.totalorder %s37, %s38
      %p49 = scmp.eq.s32.totalorder %s29, 0
      %p50 = por %p48, %p49
      %p51 = scmp.ne.s32.totalorder %s37, %s38
      %p52 = scmp.eq.s32.totalorder %s30, 1
      %p53 = por %p51, %p52
      %p55 = scmp.ne.s32.totalorder %s38, %s54
      %p56 = scmp.eq.s32.totalorder %s30, 0
      %p57 = por %p55, %p56
      %s58 = ssub.s32 %s24, %s31
      %p59 = scmp.eq.s32.totalorder %s58, 0
      %s61 = sadd.s32 %s60, 1
      %s62 = scalar_select %p59, %s60, %s61
      %p65 = pneg %p59
      %p66 = scmp.eq.s32.totalorder %s24, 1
      %p67 = por %p65, %p66
      %p68 = scmp.ne.s32.totalorder %s60, %s63
      %p69 = scmp.eq.s32.totalorder %s24, 0
      %p70 = por %p68, %p69
      %p71 = scmp.ne.s32.totalorder %s60, %s63
      %p72 = scmp.eq.s32.totalorder %s29, 1
      %p73 = por %p71, %p72
      %p74 = scmp.ne.s32.totalorder %s63, %s64
      %p75 = scmp.eq.s32.totalorder %s29, 0
      %p76 = por %p74, %p75
      %p77 = scmp.ne.s32.totalorder %s63, %s64
      %p78 = scmp.eq.s32.totalorder %s30, 1
      %p79 = por %p77, %p78
      %p81 = scmp.ne.s32.totalorder %s64, %s80
      %p82 = scmp.eq.s32.totalorder %s30, 0
      %p83 = por %p81, %p82
      %s85 = sadd.s32 %s84, 1
      %p88 = scmp.eq.s32.totalorder %s24, 1
      %p89 = scmp.ne.s32.totalorder %s84, %s86
      %p90 = scmp.eq.s32.totalorder %s24, 0
      %p91 = por %p89, %p90
      %p92 = scmp.ne.s32.totalorder %s84, %s86
      %p93 = scmp.eq.s32.totalorder %s29, 1
      %p94 = por %p92, %p93
      %p95 = scmp.ne.s32.totalorder %s86, %s87
      %p96 = scmp.eq.s32.totalorder %s29, 0
      %p97 = por %p95, %p96
      %p98 = scmp.ne.s32.totalorder %s86, %s87
      %p99 = scmp.eq.s32.totalorder %s30, 1
      %p100 = por %p98, %p99
      %p102 = scmp.ne.s32.totalorder %s87, %s101
      %p103 = scmp.eq.s32.totalorder %s30, 0
      %p104 = por %p102, %p103
      %s106 = sadd.s32 %s105, 1
      %p109 = scmp.eq.s32.totalorder %s24, 1
      %p110 = scmp.ne.s32.totalorder %s105, %s107
      %p111 = scmp.eq.s32.totalorder %s24, 0
      %p112 = por %p110, %p111
      %p113 = scmp.ne.s32.totalorder %s105, %s107
      %p114 = scmp.eq.s32.totalorder %s29, 1
      %p115 = por %p113, %p114
      %p116 = scmp.ne.s32.totalorder %s107, %s108
      %p117 = scmp.eq.s32.totalorder %s29, 0
      %p118 = por %p116, %p117
      %p119 = scmp.ne.s32.totalorder %s107, %s108
      %p120 = scmp.eq.s32.totalorder %s30, 1
      %p121 = por %p119, %p120
      %p123 = scmp.ne.s32.totalorder %s108, %s122
      %p124 = scmp.eq.s32.totalorder %s30, 0
      %p125 = por %p123, %p124
      %s127 = sadd.s32 %s126, 1
      %p130 = scmp.eq.s32.totalorder %s24, 1
      %p131 = scmp.ne.s32.totalorder %s126, %s128
      %p132 = scmp.eq.s32.totalorder %s24, 0
      %p133 = por %p131, %p132
      %p134 = scmp.ne.s32.totalorder %s126, %s128
      %p135 = scmp.eq.s32.totalorder %s29, 1
      %p136 = por %p134, %p135
      %p137 = scmp.ne.s32.totalorder %s128, %s129
      %p138 = scmp.eq.s32.totalorder %s29, 0
      %p139 = por %p137, %p138
      %p140 = scmp.ne.s32.totalorder %s128, %s129
      %p141 = scmp.eq.s32.totalorder %s30, 1
      %p142 = por %p140, %p141
      %p144 = scmp.ne.s32.totalorder %s129, %s143
      %p145 = scmp.eq.s32.totalorder %s30, 0
      %p146 = por %p144, %p145
      %s148 = sadd.s32 %s147, 1
      %p151 = scmp.eq.s32.totalorder %s24, 1
      %p152 = scmp.ne.s32.totalorder %s147, %s149
      %p153 = scmp.eq.s32.totalorder %s24, 0
      %p154 = por %p152, %p153
      %p155 = scmp.ne.s32.totalorder %s147, %s149
      %p156 = scmp.eq.s32.totalorder %s29, 1
      %p157 = por %p155, %p156
      %p158 = scmp.ne.s32.totalorder %s149, %s150
      %p159 = scmp.eq.s32.totalorder %s29, 0
      %p160 = por %p158, %p159
      %p161 = scmp.ne.s32.totalorder %s149, %s150
      %p162 = scmp.eq.s32.totalorder %s30, 1
      %p163 = por %p161, %p162
      %p165 = scmp.ne.s32.totalorder %s150, %s164
      %p166 = scmp.eq.s32.totalorder %s30, 0
      %p167 = por %p165, %p166
      %s169 = sadd.s32 %s168, 1
      %p172 = scmp.eq.s32.totalorder %s24, 1
      %p173 = scmp.ne.s32.totalorder %s168, %s170
      %p174 = scmp.eq.s32.totalorder %s24, 0
      %p175 = por %p173, %p174
      %p176 = scmp.ne.s32.totalorder %s168, %s170
      %p177 = scmp.eq.s32.totalorder %s29, 1
      %p178 = por %p176, %p177
      %p179 = scmp.ne.s32.totalorder %s170, %s171
      %p180 = scmp.eq.s32.totalorder %s29, 0
      %p181 = por %p179, %p180
      %p182 = scmp.ne.s32.totalorder %s170, %s171
      %p183 = scmp.eq.s32.totalorder %s30, 1
      %p184 = por %p182, %p183
      %p186 = scmp.ne.s32.totalorder %s171, %s185
      %p187 = scmp.eq.s32.totalorder %s30, 0
      %p188 = por %p186, %p187
      %s190 = sadd.s32 %s189, 1
      %p193 = scmp.eq.s32.totalorder %s24, 1
      %p194 = scmp.ne.s32.totalorder %s189, %s191
      %p195 = scmp.eq.s32.totalorder %s24, 0
      %p196 = por %p194, %p195
      %p197 = scmp.ne.s32.totalorder %s189, %s191
      %p198 = scmp.eq.s32.totalorder %s29, 1
      %p199 = por %p197, %p198
      %p200 = scmp.ne.s32.totalorder %s191, %s192
      %p201 = scmp.eq.s32.totalorder %s29, 0
      %p202 = por %p200, %p201
      %p203 = scmp.ne.s32.totalorder %s191, %s192
      %p204 = scmp.eq.s32.totalorder %s30, 1
      %p205 = por %p203, %p204
      %p207 = scmp.ne.s32.totalorder %s192, %s206
      %p208 = scmp.eq.s32.totalorder %s30, 0
      %p209 = por %p207, %p208
      %s210 = ssub.s32 %s24, %s31
      %p211 = scmp.eq.s32.totalorder %s210, 0
      %s213 = sadd.s32 %s212, 1
      %s214 = scalar_select %p211, %s212, %s213
      %p217 = pneg %p211
      %p218 = scmp.eq.s32.totalorder %s24, 1
      %p219 = por %p217, %p218
      %p220 = scmp.ne.s32.totalorder %s212, %s215
      %p221 = scmp.eq.s32.totalorder %s24, 0
      %p222 = por %p220, %p221
      %p223 = scmp.ne.s32.totalorder %s212, %s215
      %p224 = scmp.eq.s32.totalorder %s29, 1
      %p225 = por %p223, %p224
      %p226 = scmp.ne.s32.totalorder %s215, %s216
      %p227 = scmp.eq.s32.totalorder %s29, 0
      %p228 = por %p226, %p227
      %p229 = scmp.ne.s32.totalorder %s215, %s216
      %p230 = scmp.eq.s32.totalorder %s30, 1
      %p231 = por %p229, %p230
      %p233 = scmp.ne.s32.totalorder %s216, %s232
      %p234 = scmp.eq.s32.totalorder %s30, 0
      %p235 = por %p233, %p234
      %p236 = scmp.le.s32.totalorder 1, %s24
      %p237 = scmp.lt.s32.totalorder %s24, 3
      %p238 = pnand %p236, %p237
      %p239 = pneg %p238
      // Predicated region
      $region9: #{tpu_custom_call.1} parent=5 // pred_check
        _
      $region10: #{tpu_custom_call.1} parent=5 // pred_check_branch
        %241 = sbr.rel (%p238) target = $region12
      $region11: #{tpu_custom_call.1} parent=5 // pred_region
        %s242 = ssub.s32 %s24, 1
        // Predicated region
        $region13: #{tpu_custom_call.1} parent=11 // pred_check
          %p243 = pneg %p97
        $region14: #{tpu_custom_call.1} parent=11 // pred_check_branch
          %245 = sbr.rel (%p243) target = $region16
        $region15: #{tpu_custom_call.1} parent=11 // pred_region
          %s247 = ssub.s32 128, 128
          %248 = vsyncadd [#allocation6], %s247
          %s249 = sshll.u32 [#allocation7], 4
          %s250 = int_to_ptr.vmem [resolvable:$true] %s249
          %255 = dma.hbm_to_vmem [thread:$0]  %s2, 128, %s250, [#allocation6], 64, 64, 4
        $region16: #{tpu_custom_call.1} parent=11 // pred_fallthru
          _
        // Predicated region
        $region17: #{tpu_custom_call.1} parent=11 // pred_check
          %p256 = pneg %p118
        $region18: #{tpu_custom_call.1} parent=11 // pred_check_branch
          %258 = sbr.rel (%p256) target = $region20
        $region19: #{tpu_custom_call.1} parent=11 // pred_region
          %s260 = ssub.s32 512, 512
          %261 = vsyncadd [#allocation9], %s260
          %s262 = sshll.u32 [#allocation8], 4
          %s263 = int_to_ptr.vmem [resolvable:$true] %s262
          %268 = dma.hbm_to_vmem [thread:$0]  %s3, 512, %s263, [#allocation9], 64, 64, 4
        $region20: #{tpu_custom_call.1} parent=11 // pred_fallthru
          _
        // Predicated region
        $region21: #{tpu_custom_call.1} parent=11 // pred_check
          %p269 = pneg %p139
        $region22: #{tpu_custom_call.1} parent=11 // pred_check_branch
          %271 = sbr.rel (%p269) target = $region24
        $region23: #{tpu_custom_call.1} parent=11 // pred_region
          _
        $region24: #{tpu_custom_call.1} parent=11 // pred_fallthru
          _
        // Predicated region
        $region25: #{tpu_custom_call.1} parent=11 // pred_check
          %p272 = pneg %p160
        $region26: #{tpu_custom_call.1} parent=11 // pred_check_branch
          %274 = sbr.rel (%p272) target = $region28
        $region27: #{tpu_custom_call.1} parent=11 // pred_region
          _
        $region28: #{tpu_custom_call.1} parent=11 // pred_fallthru
          _
        // Predicated region
        $region29: #{tpu_custom_call.1} parent=11 // pred_check
          %p275 = pneg %p181
        $region30: #{tpu_custom_call.1} parent=11 // pred_check_branch
          %277 = sbr.rel (%p275) target = $region32
        $region31: #{tpu_custom_call.1} parent=11 // pred_region
          _
        $region32: #{tpu_custom_call.1} parent=11 // pred_fallthru
          _
        // Predicated region
        $region33: #{tpu_custom_call.1} parent=11 // pred_check
          %p278 = pneg %p202
        $region34: #{tpu_custom_call.1} parent=11 // pred_check_branch
          %280 = sbr.rel (%p278) target = $region36
        $region35: #{tpu_custom_call.1} parent=11 // pred_region
          _
        $region36: #{tpu_custom_call.1} parent=11 // pred_fallthru
          _
      $region12: #{tpu_custom_call.1} parent=5 // pred_fallthru
        _
      %p281 = scmp.lt.s32.totalorder %s24, 2
      // Predicated region
      $region37: #{tpu_custom_call.1} parent=5 // pred_check
        %p282 = pneg %p281
      $region38: #{tpu_custom_call.1} parent=5 // pred_check_branch
        %284 = sbr.rel (%p282) target = $region40
      $region39: #{tpu_custom_call.1} parent=5 // pred_region
        // Predicated region
        $region41: #{tpu_custom_call.1} parent=39 // pred_check
          %p285 = pneg %p44
        $region42: #{tpu_custom_call.1} parent=39 // pred_check_branch
          %287 = sbr.rel (%p285) target = $region44
        $region43: #{tpu_custom_call.1} parent=39 // pred_region
          %s288 = sand.u32 %s34, 1
          %s289 = scalar_lea.sflag [#allocation3], %s288
          %s290 = sand.u32 %s34, 1
          %s291 = smul.addr %s290, 4
          %s292 = scalar_lea.vmem [#allocation2], %s291
          %s294 = ssub.s32 64, 64
          %295 = vsyncadd %s289, %s294
          %s296 = smul.addr %s24, 64
          %s297 = scalar_lea.hbm %s0, %s296
          %s299 = sshll.u32 %s292, 4
          %s300 = int_to_ptr.vmem [resolvable:$true] %s299
          %302 = dma.hbm_to_vmem [thread:$0]  %s297, 64, %s300, %s289
        $region44: #{tpu_custom_call.1} parent=39 // pred_fallthru
          _
        // Predicated region
        $region45: #{tpu_custom_call.1} parent=39 // pred_check
          %p303 = pneg %p70
        $region46: #{tpu_custom_call.1} parent=39 // pred_check_branch
          %305 = sbr.rel (%p303) target = $region48
        $region47: #{tpu_custom_call.1} parent=39 // pred_region
          %s306 = sand.u32 %s24, 1
          %s307 = scalar_lea.sflag [#allocation6], %s306
          %s308 = sand.u32 %s60, 1
          %s309 = smul.addr %s308, 4
          %s310 = scalar_lea.vmem [#allocation5], %s309
          %s312 = ssub.s32 64, 64
          %313 = vsyncadd %s307, %s312
          %s314 = smul.addr %s24, 64
          %s315 = scalar_lea.hbm %s1, %s314
          %s317 = sshll.u32 %s310, 4
          %s318 = int_to_ptr.vmem [resolvable:$true] %s317
          %320 = dma.hbm_to_vmem [thread:$0]  %s315, 64, %s318, %s307
        $region48: #{tpu_custom_call.1} parent=39 // pred_fallthru
          _
      $region40: #{tpu_custom_call.1} parent=5 // pred_fallthru
        _
      %p321 = scmp.le.s32.totalorder 1, %s24
      %p322 = scmp.lt.s32.totalorder %s24, 3
      %p323 = pnand %p321, %p322
      %p324 = pneg %p323
      // Predicated region
      $region49: #{tpu_custom_call.1} parent=5 // pred_check
        _
      $region50: #{tpu_custom_call.1} parent=5 // pred_check_branch
        %326 = sbr.rel (%p323) target = $region52
      $region51: #{tpu_custom_call.1} parent=5 // pred_region
        %s327 = ssub.s32 %s24, 1
        %s328 = sand.u32 %s37, 1
        %s329 = scalar_lea.sflag [#allocation3], %s328
        %s330 = sand.u32 %s37, 1
        %s331 = smul.addr %s330, 4
        %s332 = scalar_lea.vmem [#allocation2], %s331
        // Predicated region
        $region53: #{tpu_custom_call.1} parent=51 // pred_check
          %p333 = pneg %p50
        $region54: #{tpu_custom_call.1} parent=51 // pred_check_branch
          %335 = sbr.rel (%p333) target = $region56
        $region55: #{tpu_custom_call.1} parent=51 // pred_region
          %336 = dma.done %s329, 64
        $region56: #{tpu_custom_call.1} parent=51 // pred_fallthru
          _
        %s337 = sand.u32 %s29, 1
        %s338 = scalar_lea.sflag [#allocation6], %s337
        %s339 = sand.u32 %s63, 1
        %s340 = smul.addr %s339, 4
        %s341 = scalar_lea.vmem [#allocation5], %s340
        // Predicated region
        $region57: #{tpu_custom_call.1} parent=51 // pred_check
          %p342 = pneg %p76
        $region58: #{tpu_custom_call.1} parent=51 // pred_check_branch
          %344 = sbr.rel (%p342) target = $region60
        $region59: #{tpu_custom_call.1} parent=51 // pred_region
          %345 = dma.done %s338, 64
        $region60: #{tpu_custom_call.1} parent=51 // pred_fallthru
          _
        // Predicated region
        $region61: #{tpu_custom_call.1} parent=51 // pred_check
          %p346 = pneg %p97
        $region62: #{tpu_custom_call.1} parent=51 // pred_check_branch
          %348 = sbr.rel (%p346) target = $region64
        $region63: #{tpu_custom_call.1} parent=51 // pred_region
          %349 = dma.done [#allocation6], 128
        $region64: #{tpu_custom_call.1} parent=51 // pred_fallthru
          _
        // Predicated region
        $region65: #{tpu_custom_call.1} parent=51 // pred_check
          %p350 = pneg %p118
        $region66: #{tpu_custom_call.1} parent=51 // pred_check_branch
          %352 = sbr.rel (%p350) target = $region68
        $region67: #{tpu_custom_call.1} parent=51 // pred_region
          %353 = dma.done [#allocation9], 512
        $region68: #{tpu_custom_call.1} parent=51 // pred_fallthru
          _
        %s354 = sand.u32 %s37, 1
        %s355 = scalar_lea.sflag [#allocation3], %s354
        %s356 = sand.u32 %s37, 1
        %s357 = smul.addr %s356, 4
        %s358 = scalar_lea.vmem [#allocation2], %s357
        %p359 = pneg %p50
        %p360 = pneg %p47
        %s361 = sand.u32 %s29, 1
        %s362 = scalar_lea.sflag [#allocation6], %s361
        %s363 = sand.u32 %s63, 1
        %s364 = smul.addr %s363, 4
        %s365 = scalar_lea.vmem [#allocation5], %s364
        %p366 = pneg %p76
        %p367 = pneg %p73
        %p368 = pneg %p97
        %p369 = pneg %p94
        %p370 = pneg %p118
        %p371 = pneg %p115
        %p372 = pneg %p139
        %p373 = pneg %p136
        %p374 = pneg %p160
        %p375 = pneg %p157
        %p376 = pneg %p181
        %p377 = pneg %p178
        %p378 = pneg %p202
        %p379 = pneg %p199
        %p380 = pneg %p228
        %p381 = pneg %p225
        %s382 = sand.u32 %s215, 1
        %s383 = scalar_lea.sflag [#allocation4], %s382
        %s384 = sand.u32 %s215, 1
        %s385 = scalar_lea.vmem [#allocation10], %s384
        %v387 = vld [vmem:[%s332] sm:$0xf]
        %v388 = vld [vmem:[%s341] sm:$0xf]
        %v389 = vunpack.c.l.bf16 %v388
        %v390 = vld [vmem:[#allocation7] sm:$0xf]
        %v391 = vld [vmem:[#allocation7 + $0x4] sm:$0x3]
        %v392 = vld [vmem:[%s5] sm:$0x1]
        %v393 = vlaneseq
        %v394 = vshrl.u32 %v393, 7
        %v395 = vsub.s32 0, %v394
        %v396 = vrot.slane %v392, %v395
        %v399 = vunpack.c.l.b16 %v390
        %v400 = vunpack.c.l.b16 %v391
        %v401 = vpack.c.b16 %v400, %v399
        %vm402 = vcmask 97280
        %v404 = vsel %vm402, %v387, 0
        %vm406 = vcmask 1045504
        %v408 = vsel %vm406, %v401, 0
        %410 = vmatprep.subr.bf16.mxu0 0
        %411 = vmatpush1.bf16.msra.mxu0 %v408
        %412 = vmatprep.subr.bf16.mxu0 0
        %413 = vmatpush1.bf16.msra.mxu0 0
        %414 = vmatprep.subr.bf16.mxu0 0
        %415 = vmatpush1.bf16.msra.mxu0 0
        %416 = vmatprep.subr.bf16.mxu0 0
        %417 = vmatpush1.bf16.msra.mxu0 0
        %418 = vmatprep.subr.bf16.mxu0 0
        %419 = vmatpush1.bf16.msra.mxu0 0
        %420 = vmatprep.subr.bf16.mxu0 0
        %421 = vmatpush1.bf16.msra.mxu0 0
        %422 = vmatprep.subr.bf16.mxu0 0
        %423 = vmatpush1.bf16.msra.mxu0 0
        %424 = vmatprep.subr.bf16.mxu0 0
        %425 = vmatpush1.bf16.msra.mxu0 0
        %426 = vmatprep.subr.bf16.mxu0 0
        %427 = vmatpush1.bf16.msra.mxu0 0
        %428 = vmatprep.subr.bf16.mxu0 0
        %429 = vmatpush1.bf16.msra.mxu0 0
        %430 = vmatprep.subr.bf16.mxu0 0
        %431 = vmatpush1.bf16.msra.mxu0 0
        %432 = vmatprep.subr.bf16.mxu0 0
        %433 = vmatpush1.bf16.msra.mxu0 0
        %434 = vmatprep.subr.bf16.mxu0 0
        %435 = vmatpush1.bf16.msra.mxu0 0
        %436 = vmatprep.subr.bf16.mxu0 0
        %437 = vmatpush1.bf16.msra.mxu0 0
        %438 = vmatprep.subr.bf16.mxu0 0
        %439 = vmatpush1.bf16.msra.mxu0 0
        %440 = vmatprep.subr.bf16.mxu0 0
        %441 = vmatpush1.bf16.msra.mxu0 0
        %442 = vmatprep.mubr.bf16.mxu0 0
        %443 = vmatmul.mubr.bf16.gmra.mrb[0].mxu0 %v404
        %v444 = vpop.f32.mrb[0].mxu0
        %v445 = vadd.f32 %v396, %v444
        %v446 = vpop.f32.mrb[0].mxu0
        %v447 = vpop.f32.mrb[0].mxu0
        %v448 = vpop.f32.mrb[0].mxu0
        %449 = vdwg.mxu0
        %v450 = vpack.c.bf16 %v445, %v445
        %v451 = vld [vmem:[#allocation8] sm:$0xf]
        %v452 = vld [vmem:[#allocation8 + $0x4] sm:$0xf]
        %v453 = vld [vmem:[#allocation8 + $0x8] sm:$0xf]
        %v454 = vld [vmem:[#allocation8 + $0xc] sm:$0xf]
        %v455 = vld [vmem:[%s4] sm:$0x1]
        %v456 = vlaneseq
        %v457 = vshrl.u32 %v456, 7
        %v458 = vsub.s32 0, %v457
        %v459 = vrot.slane %v455, %v458
        %v464 = vunpack.c.l.b16 %v451
        %v465 = vunpack.c.l.b16 %v452
        %v466 = vunpack.c.l.b16 %v453
        %v467 = vunpack.c.l.b16 %v454
        %v468 = vpack.c.b16 %v465, %v464
        %v469 = vpack.c.b16 %v467, %v466
        %vm472 = vcmask 261120
        %v474 = vsel %vm472, %v450, 0
        %476 = vmatprep.subr.bf16.mxu0 0
        %477 = vmatpush1.bf16.msra.mxu0 %v468
        %478 = vmatprep.subr.bf16.mxu0 0
        %479 = vmatpush1.bf16.msra.mxu0 %v469
        %480 = vmatprep.subr.bf16.mxu0 0
        %481 = vmatpush1.bf16.msra.mxu0 0
        %482 = vmatprep.subr.bf16.mxu0 0
        %483 = vmatpush1.bf16.msra.mxu0 0
        %484 = vmatprep.subr.bf16.mxu0 0
        %485 = vmatpush1.bf16.msra.mxu0 0
        %486 = vmatprep.subr.bf16.mxu0 0
        %487 = vmatpush1.bf16.msra.mxu0 0
        %488 = vmatprep.subr.bf16.mxu0 0
        %489 = vmatpush1.bf16.msra.mxu0 0
        %490 = vmatprep.subr.bf16.mxu0 0
        %491 = vmatpush1.bf16.msra.mxu0 0
        %492 = vmatprep.subr.bf16.mxu0 0
        %493 = vmatpush1.bf16.msra.mxu0 0
        %494 = vmatprep.subr.bf16.mxu0 0
        %495 = vmatpush1.bf16.msra.mxu0 0
        %496 = vmatprep.subr.bf16.mxu0 0
        %497 = vmatpush1.bf16.msra.mxu0 0
        %498 = vmatprep.subr.bf16.mxu0 0
        %499 = vmatpush1.bf16.msra.mxu0 0
        %500 = vmatprep.subr.bf16.mxu0 0
        %501 = vmatpush1.bf16.msra.mxu0 0
        %502 = vmatprep.subr.bf16.mxu0 0
        %503 = vmatpush1.bf16.msra.mxu0 0
        %504 = vmatprep.subr.bf16.mxu0 0
        %505 = vmatpush1.bf16.msra.mxu0 0
        %506 = vmatprep.subr.bf16.mxu0 0
        %507 = vmatpush1.bf16.msra.mxu0 0
        %508 = vmatprep.mubr.bf16.mxu0 0
        %509 = vmatmul.mubr.bf16.gmra.mrb[0].mxu0 %v474
        %v510 = vpop.f32.mrb[0].mxu0
        %v511 = vadd.f32 %v459, %v510
        %v512 = vpop.f32.mrb[0].mxu0
        %v513 = vpop.f32.mrb[0].mxu0
        %v514 = vpop.f32.mrb[0].mxu0
        %515 = vdwg.mxu0
        %517 = vrot.lane.b32.xlu0 %v511, 95
        %v518 = vpop.permute.xlu0 %517
        %520 = vxpose.xlu0.b32.start [1/16] %v518, 128
        %521 = vxpose.xlu0.b32.cont [2/16] 0.0, 128
        %522 = vxpose.xlu0.b32.cont [3/16] 0.0, 128
        %523 = vxpose.xlu0.b32.cont [4/16] 0.0, 128
        %524 = vxpose.xlu0.b32.cont [5/16] 0.0, 128
        %525 = vxpose.xlu0.b32.cont [6/16] 0.0, 128
        %526 = vxpose.xlu0.b32.cont [7/16] 0.0, 128
        %527 = vxpose.xlu0.b32.cont [8/16] 0.0, 128
        %528 = vxpose.xlu0.b32.cont [9/16] 0.0, 128
        %529 = vxpose.xlu0.b32.cont [10/16] 0.0, 128
        %530 = vxpose.xlu0.b32.cont [11/16] 0.0, 128
        %531 = vxpose.xlu0.b32.cont [12/16] 0.0, 128
        %532 = vxpose.xlu0.b32.cont [13/16] 0.0, 128
        %533 = vxpose.xlu0.b32.cont [14/16] 0.0, 128
        %534 = vxpose.xlu0.b32.cont [15/16] 0.0, 128
        %535 = vxpose.xlu0.b32.end [16/16] 0.0, 128
        %v536 = vpop.trf.xlu0
        %v537 = vpop.trf.xlu0
        %v538 = vpop.trf.xlu0
        %v539 = vpop.trf.xlu0
        %v540 = vpop.trf.xlu0
        %v541 = vpop.trf.xlu0
        %v542 = vpop.trf.xlu0
        %v543 = vpop.trf.xlu0
        %v544 = vpop.trf.xlu0
        %v545 = vpop.trf.xlu0
        %v546 = vpop.trf.xlu0
        %v547 = vpop.trf.xlu0
        %v548 = vpop.trf.xlu0
        %v549 = vpop.trf.xlu0
        %v550 = vpop.trf.xlu0
        %v551 = vpop.trf.xlu0
        %552 = vset.pattern.permute.xlu0 32
        %553 = vperm.xlu0 %552, %v511
        %v554 = vpop.permute.xlu0 %553
        %v556 = vlaneseq
        %v557 = vshrl.u32 %v556, 7
        %v558 = vsub.s32 0, %v557
        %v559 = vrot.slane %v536, %v558
        %v560 = vadd.f32 %v554, %v559
        %vm561 = vcmp.ge.f32.partialorder %v560, 0.0
        %v562 = vmul.f32 %v560, 0.2
        %v563 = vsel %vm561, %v560, %v562
        %v564 = vadd.f32 %v563, %v389
        %vm565 = vcmask 64512
        %v566 = vsel %vm565, %v564, -inf
        %v567 = vrot.slane %v566, 4
        %v568 = vmax.f32 %v566, %v567
        %v569 = vrot.slane %v568, 2
        %v570 = vmax.f32 %v568, %v569
        %v571 = vrot.slane %v570, 1
        %v572 = vmax.f32 %v570, %v571
        %v573 = vsub.f32 %v564, %v572
        %v574 = vmul.f32 %v573, 1.442695
        %v575 = vpow.pop %v574
        %v576 = vsel %vm565, %v575, 0.0
        %v577 = vrot.slane %v576, 4
        %v578 = vadd.f32 %v576, %v577
        %v579 = vrot.slane %v578, 2
        %v580 = vadd.f32 %v578, %v579
        %v581 = vrot.slane %v580, 1
        %v582 = vadd.f32 %v580, %v581
        %v583 = vrcp.pop %v582
        %v584 = vmul.f32 %v575, %v583
        %586 = vset.pattern.permute.xlu0 0
        %587 = vperm.xlu0 %586, %v584
        %v588 = vpop.permute.xlu0 %587
        %v590 = vlaneseq
        %v591 = vshrl.u32 %v590, 7
        %v592 = vsub.s32 0, %v591
        %v593 = vrot.slane %v511, %v592
        %v594 = vmul.f32 %v588, %v593
        %595 = vset.pattern.permute.xlu0 1
        %596 = vperm.xlu0 %595, %v584
        %v597 = vpop.permute.xlu0 %596
        %v599 = vlaneseq
        %v600 = vshrl.u32 %v599, 7
        %v601 = vsub.s32 1, %v600
        %v602 = vrot.slane %v511, %v601
        %v603 = vmul.f32 %v597, %v602
        %v604 = vadd.f32 %v594, %v603
        %605 = vset.pattern.permute.xlu0 2
        %606 = vperm.xlu0 %605, %v584
        %v607 = vpop.permute.xlu0 %606
        %v609 = vlaneseq
        %v610 = vshrl.u32 %v609, 7
        %v611 = vsub.s32 2, %v610
        %v612 = vrot.slane %v511, %v611
        %v613 = vmul.f32 %v607, %v612
        %v614 = vadd.f32 %v604, %v613
        %615 = vset.pattern.permute.xlu0 3
        %616 = vperm.xlu0 %615, %v584
        %v617 = vpop.permute.xlu0 %616
        %v619 = vlaneseq
        %v620 = vshrl.u32 %v619, 7
        %v621 = vsub.s32 3, %v620
        %v622 = vrot.slane %v511, %v621
        %v623 = vmul.f32 %v617, %v622
        %v624 = vadd.f32 %v614, %v623
        %625 = vset.pattern.permute.xlu0 4
        %626 = vperm.xlu0 %625, %v584
        %v627 = vpop.permute.xlu0 %626
        %v629 = vlaneseq
        %v630 = vshrl.u32 %v629, 7
        %v631 = vsub.s32 4, %v630
        %v632 = vrot.slane %v511, %v631
        %v633 = vmul.f32 %v627, %v632
        %v634 = vadd.f32 %v624, %v633
        %635 = vset.pattern.permute.xlu0 5
        %636 = vperm.xlu0 %635, %v584
        %v637 = vpop.permute.xlu0 %636
        %v639 = vlaneseq
        %v640 = vshrl.u32 %v639, 7
        %v641 = vsub.s32 5, %v640
        %v642 = vrot.slane %v511, %v641
        %v643 = vmul.f32 %v637, %v642
        %v644 = vadd.f32 %v634, %v643
        %645 = vset.pattern.permute.xlu0 6
        %646 = vperm.xlu0 %645, %v584
        %v647 = vpop.permute.xlu0 %646
        %v649 = vlaneseq
        %v650 = vshrl.u32 %v649, 7
        %v651 = vsub.s32 6, %v650
        %v652 = vrot.slane %v511, %v651
        %v653 = vmul.f32 %v647, %v652
        %v654 = vadd.f32 %v644, %v653
        %655 = vset.pattern.permute.xlu0 7
        %656 = vperm.xlu0 %655, %v584
        %v657 = vpop.permute.xlu0 %656
        %v659 = vlaneseq
        %v660 = vshrl.u32 %v659, 7
        %v661 = vsub.s32 7, %v660
        %v662 = vrot.slane %v511, %v661
        %v663 = vmul.f32 %v657, %v662
        %v664 = vadd.f32 %v654, %v663
        %v665 = vld [vmem:[%s5 + $0x1] sm:$0x1]
        %v666 = vlaneseq
        %v667 = vshrl.u32 %v666, 7
        %v668 = vsub.s32 0, %v667
        %v669 = vrot.slane %v665, %v668
        %v670 = vadd.f32 %v664, %v669
        %vm671 = vcmp.gt.f32.partialorder %v670, 0.0
        %v672 = vmin.f32 %v670, 0.0
        %v673 = vmul.f32 %v672, 1.442695
        %v674 = vpow.pop %v673
        %v675 = vsub.f32 %v674, 1.0
        %v676 = vsel %vm671, %v670, %v675
        %v677 = vpack.c.bf16 %v676, %v676
        %s678 = scalar_lea.vmem [#allocation8], 16
        %v679 = vld [vmem:[%s678] sm:$0xf]
        %v680 = vld [vmem:[%s678 + $0x4] sm:$0xf]
        %v681 = vld [vmem:[%s678 + $0x8] sm:$0xf]
        %v682 = vld [vmem:[%s678 + $0xc] sm:$0xf]
        %v683 = vld [vmem:[%s4 + $0x1] sm:$0x1]
        %v684 = vlaneseq
        %v685 = vshrl.u32 %v684, 7
        %v686 = vsub.s32 0, %v685
        %v687 = vrot.slane %v683, %v686
        %v692 = vunpack.c.l.b16 %v679
        %v693 = vunpack.c.l.b16 %v680
        %v694 = vunpack.c.l.b16 %v681
        %v695 = vunpack.c.l.b16 %v682
        %v696 = vpack.c.b16 %v693, %v692
        %v697 = vpack.c.b16 %v695, %v694
        %v701 = vsel %vm472, %v677, 0
        %703 = vmatprep.subr.bf16.mxu0 0
        %704 = vmatpush1.bf16.msra.mxu0 %v696
        %705 = vmatprep.subr.bf16.mxu0 0
        %706 = vmatpush1.bf16.msra.mxu0 %v697
        %707 = vmatprep.subr.bf16.mxu0 0
        %708 = vmatpush1.bf16.msra.mxu0 0
        %709 = vmatprep.subr.bf16.mxu0 0
        %710 = vmatpush1.bf16.msra.mxu0 0
        %711 = vmatprep.subr.bf16.mxu0 0
        %712 = vmatpush1.bf16.msra.mxu0 0
        %713 = vmatprep.subr.bf16.mxu0 0
        %714 = vmatpush1.bf16.msra.mxu0 0
        %715 = vmatprep.subr.bf16.mxu0 0
        %716 = vmatpush1.bf16.msra.mxu0 0
        %717 = vmatprep.subr.bf16.mxu0 0
        %718 = vmatpush1.bf16.msra.mxu0 0
        %719 = vmatprep.subr.bf16.mxu0 0
        %720 = vmatpush1.bf16.msra.mxu0 0
        %721 = vmatprep.subr.bf16.mxu0 0
        %722 = vmatpush1.bf16.msra.mxu0 0
        %723 = vmatprep.subr.bf16.mxu0 0
        %724 = vmatpush1.bf16.msra.mxu0 0
        %725 = vmatprep.subr.bf16.mxu0 0
        %726 = vmatpush1.bf16.msra.mxu0 0
        %727 = vmatprep.subr.bf16.mxu0 0
        %728 = vmatpush1.bf16.msra.mxu0 0
        %729 = vmatprep.subr.bf16.mxu0 0
        %730 = vmatpush1.bf16.msra.mxu0 0
        %731 = vmatprep.subr.bf16.mxu0 0
        %732 = vmatpush1.bf16.msra.mxu0 0
        %733 = vmatprep.subr.bf16.mxu0 0
        %734 = vmatpush1.bf16.msra.mxu0 0
        %735 = vmatprep.mubr.bf16.mxu0 0
        %736 = vmatmul.mubr.bf16.gmra.mrb[0].mxu0 %v701
        %v737 = vpop.f32.mrb[0].mxu0
        %v738 = vadd.f32 %v687, %v737
        %v739 = vpop.f32.mrb[0].mxu0
        %v740 = vpop.f32.mrb[0].mxu0
        %v741 = vpop.f32.mrb[0].mxu0
        %742 = vdwg.mxu0
        %744 = vrot.lane.b32.xlu0 %v738, 95
        %v745 = vpop.permute.xlu0 %744
        %747 = vxpose.xlu0.b32.start [1/16] %v745, 128
        %748 = vxpose.xlu0.b32.cont [2/16] 0.0, 128
        %749 = vxpose.xlu0.b32.cont [3/16] 0.0, 128
        %750 = vxpose.xlu0.b32.cont [4/16] 0.0, 128
        %751 = vxpose.xlu0.b32.cont [5/16] 0.0, 128
        %752 = vxpose.xlu0.b32.cont [6/16] 0.0, 128
        %753 = vxpose.xlu0.b32.cont [7/16] 0.0, 128
        %754 = vxpose.xlu0.b32.cont [8/16] 0.0, 128
        %755 = vxpose.xlu0.b32.cont [9/16] 0.0, 128
        %756 = vxpose.xlu0.b32.cont [10/16] 0.0, 128
        %757 = vxpose.xlu0.b32.cont [11/16] 0.0, 128
        %758 = vxpose.xlu0.b32.cont [12/16] 0.0, 128
        %759 = vxpose.xlu0.b32.cont [13/16] 0.0, 128
        %760 = vxpose.xlu0.b32.cont [14/16] 0.0, 128
        %761 = vxpose.xlu0.b32.cont [15/16] 0.0, 128
        %762 = vxpose.xlu0.b32.end [16/16] 0.0, 128
        %v763 = vpop.trf.xlu0
        %v764 = vpop.trf.xlu0
        %v765 = vpop.trf.xlu0
        %v766 = vpop.trf.xlu0
        %v767 = vpop.trf.xlu0
        %v768 = vpop.trf.xlu0
        %v769 = vpop.trf.xlu0
        %v770 = vpop.trf.xlu0
        %v771 = vpop.trf.xlu0
        %v772 = vpop.trf.xlu0
        %v773 = vpop.trf.xlu0
        %v774 = vpop.trf.xlu0
        %v775 = vpop.trf.xlu0
        %v776 = vpop.trf.xlu0
        %v777 = vpop.trf.xlu0
        %v778 = vpop.trf.xlu0
        %779 = vset.pattern.permute.xlu0 32
        %780 = vperm.xlu0 %779, %v738
        %v781 = vpop.permute.xlu0 %780
        %v783 = vlaneseq
        %v784 = vshrl.u32 %v783, 7
        %v785 = vsub.s32 0, %v784
        %v786 = vrot.slane %v763, %v785
        %v787 = vadd.f32 %v781, %v786
        %vm788 = vcmp.ge.f32.partialorder %v787, 0.0
        %v789 = vmul.f32 %v787, 0.2
        %v790 = vsel %vm788, %v787, %v789
        %v791 = vadd.f32 %v790, %v389
        %v792 = vsel %vm565, %v791, -inf
        %v793 = vrot.slane %v792, 4
        %v794 = vmax.f32 %v792, %v793
        %v795 = vrot.slane %v794, 2
        %v796 = vmax.f32 %v794, %v795
        %v797 = vrot.slane %v796, 1
        %v798 = vmax.f32 %v796, %v797
        %v799 = vsub.f32 %v791, %v798
        %v800 = vmul.f32 %v799, 1.442695
        %v801 = vpow.pop %v800
        %v802 = vsel %vm565, %v801, 0.0
        %v803 = vrot.slane %v802, 4
        %v804 = vadd.f32 %v802, %v803
        %v805 = vrot.slane %v804, 2
        %v806 = vadd.f32 %v804, %v805
        %v807 = vrot.slane %v806, 1
        %v808 = vadd.f32 %v806, %v807
        %v809 = vrcp.pop %v808
        %v810 = vmul.f32 %v801, %v809
        %812 = vset.pattern.permute.xlu0 0
        %813 = vperm.xlu0 %812, %v810
        %v814 = vpop.permute.xlu0 %813
        %v816 = vlaneseq
        %v817 = vshrl.u32 %v816, 7
        %v818 = vsub.s32 0, %v817
        %v819 = vrot.slane %v738, %v818
        %v820 = vmul.f32 %v814, %v819
        %821 = vset.pattern.permute.xlu0 1
        %822 = vperm.xlu0 %821, %v810
        %v823 = vpop.permute.xlu0 %822
        %v825 = vlaneseq
        %v826 = vshrl.u32 %v825, 7
        %v827 = vsub.s32 1, %v826
        %v828 = vrot.slane %v738, %v827
        %v829 = vmul.f32 %v823, %v828
        %v830 = vadd.f32 %v820, %v829
        %831 = vset.pattern.permute.xlu0 2
        %832 = vperm.xlu0 %831, %v810
        %v833 = vpop.permute.xlu0 %832
        %v835 = vlaneseq
        %v836 = vshrl.u32 %v835, 7
        %v837 = vsub.s32 2, %v836
        %v838 = vrot.slane %v738, %v837
        %v839 = vmul.f32 %v833, %v838
        %v840 = vadd.f32 %v830, %v839
        %841 = vset.pattern.permute.xlu0 3
        %842 = vperm.xlu0 %841, %v810
        %v843 = vpop.permute.xlu0 %842
        %v845 = vlaneseq
        %v846 = vshrl.u32 %v845, 7
        %v847 = vsub.s32 3, %v846
        %v848 = vrot.slane %v738, %v847
        %v849 = vmul.f32 %v843, %v848
        %v850 = vadd.f32 %v840, %v849
        %851 = vset.pattern.permute.xlu0 4
        %852 = vperm.xlu0 %851, %v810
        %v853 = vpop.permute.xlu0 %852
        %v855 = vlaneseq
        %v856 = vshrl.u32 %v855, 7
        %v857 = vsub.s32 4, %v856
        %v858 = vrot.slane %v738, %v857
        %v859 = vmul.f32 %v853, %v858
        %v860 = vadd.f32 %v850, %v859
        %861 = vset.pattern.permute.xlu0 5
        %862 = vperm.xlu0 %861, %v810
        %v863 = vpop.permute.xlu0 %862
        %v865 = vlaneseq
        %v866 = vshrl.u32 %v865, 7
        %v867 = vsub.s32 5, %v866
        %v868 = vrot.slane %v738, %v867
        %v869 = vmul.f32 %v863, %v868
        %v870 = vadd.f32 %v860, %v869
        %871 = vset.pattern.permute.xlu0 6
        %872 = vperm.xlu0 %871, %v810
        %v873 = vpop.permute.xlu0 %872
        %v875 = vlaneseq
        %v876 = vshrl.u32 %v875, 7
        %v877 = vsub.s32 6, %v876
        %v878 = vrot.slane %v738, %v877
        %v879 = vmul.f32 %v873, %v878
        %v880 = vadd.f32 %v870, %v879
        %881 = vset.pattern.permute.xlu0 7
        %882 = vperm.xlu0 %881, %v810
        %v883 = vpop.permute.xlu0 %882
        %v885 = vlaneseq
        %v886 = vshrl.u32 %v885, 7
        %v887 = vsub.s32 7, %v886
        %v888 = vrot.slane %v738, %v887
        %v889 = vmul.f32 %v883, %v888
        %v890 = vadd.f32 %v880, %v889
        %v891 = vld [vmem:[%s5 + $0x2] sm:$0x1]
        %v892 = vlaneseq
        %v893 = vshrl.u32 %v892, 7
        %v894 = vsub.s32 0, %v893
        %v895 = vrot.slane %v891, %v894
        %v896 = vadd.f32 %v890, %v895
        %v897 = vpack.c.bf16 %v896, %v896
        %v898 = vld [vmem:[%s6] sm:$0xf]
        %v899 = vld [vmem:[%s6 + $0x4] sm:$0xf]
        %v900 = vld [vmem:[%s6 + $0x8] sm:$0xf]
        %v901 = vld [vmem:[%s6 + $0xc] sm:$0xf]
        %v902 = vld [vmem:[%s7] sm:$0x1]
        %v904 = vlaneseq
        %v905 = vshrl.u32 %v904, 7
        %v906 = vsub.s32 0, %v905
        %v907 = vrot.slane %v902, %v906
        %v913 = vunpack.c.l.b16 %v898
        %v914 = vunpack.c.l.b16 %v899
        %v915 = vunpack.c.l.b16 %v900
        %v916 = vunpack.c.l.b16 %v901
        %v917 = vpack.c.b16 %v914, %v913
        %v918 = vpack.c.b16 %v916, %v915
        %v922 = vsel %vm472, %v897, 0
        %924 = vmatprep.subr.bf16.mxu0 0
        %925 = vmatpush1.bf16.msra.mxu0 %v917
        %926 = vmatprep.subr.bf16.mxu0 0
        %927 = vmatpush1.bf16.msra.mxu0 %v918
        %928 = vmatprep.subr.bf16.mxu0 0
        %929 = vmatpush1.bf16.msra.mxu0 0
        %930 = vmatprep.subr.bf16.mxu0 0
        %931 = vmatpush1.bf16.msra.mxu0 0
        %932 = vmatprep.subr.bf16.mxu0 0
        %933 = vmatpush1.bf16.msra.mxu0 0
        %934 = vmatprep.subr.bf16.mxu0 0
        %935 = vmatpush1.bf16.msra.mxu0 0
        %936 = vmatprep.subr.bf16.mxu0 0
        %937 = vmatpush1.bf16.msra.mxu0 0
        %938 = vmatprep.subr.bf16.mxu0 0
        %939 = vmatpush1.bf16.msra.mxu0 0
        %940 = vmatprep.subr.bf16.mxu0 0
        %941 = vmatpush1.bf16.msra.mxu0 0
        %942 = vmatprep.subr.bf16.mxu0 0
        %943 = vmatpush1.bf16.msra.mxu0 0
        %944 = vmatprep.subr.bf16.mxu0 0
        %945 = vmatpush1.bf16.msra.mxu0 0
        %946 = vmatprep.subr.bf16.mxu0 0
        %947 = vmatpush1.bf16.msra.mxu0 0
        %948 = vmatprep.subr.bf16.mxu0 0
        %949 = vmatpush1.bf16.msra.mxu0 0
        %950 = vmatprep.subr.bf16.mxu0 0
        %951 = vmatpush1.bf16.msra.mxu0 0
        %952 = vmatprep.subr.bf16.mxu0 0
        %953 = vmatpush1.bf16.msra.mxu0 0
        %954 = vmatprep.subr.bf16.mxu0 0
        %955 = vmatpush1.bf16.msra.mxu0 0
        %956 = vmatprep.mubr.bf16.mxu0 0
        %957 = vmatmul.mubr.bf16.gmra.mrb[0].mxu0 %v922
        %v958 = vpop.f32.mrb[0].mxu0
        %v959 = vadd.f32 %v907, %v958
        %v960 = vpop.f32.mrb[0].mxu0
        %v961 = vpop.f32.mrb[0].mxu0
        %v962 = vpop.f32.mrb[0].mxu0
        %963 = vdwg.mxu0
        %v964 = vxor.u32 %v959, 2147483648
        %v965 = vmul.f32 %v964, 1.442695
        %v966 = vpow.pop %v965
        %v967 = vadd.f32 %v966, 1.0
        %v968 = vrcp.pop %v967
        %v969 = vmul.f32 1.0, %v968
        %971 = vset.pattern.permute.xlu0 127
        %972 = vperm.xlu0 %971, %v969
        %v973 = vpop.permute.xlu0 %972
        %v975 = vmul.f32 %v973, %v959
        %v976 = vrot.slane %v975, 4
        %v977 = vadd.f32 %v975, %v976
        %v978 = vrot.slane %v977, 2
        %v979 = vadd.f32 %v977, %v978
        %v980 = vrot.slane %v979, 1
        %v981 = vadd.f32 %v979, %v980
        %v982 = vrcp.pop 8.0
        %v983 = vmul.f32 %v981, %v982
        %984 = vst [vmem:[%s385] sm:$0x1] %v983
        %s985 = sand.u32 %s215, 1
        %s986 = scalar_lea.sflag [#allocation4], %s985
        %s987 = sand.u32 %s215, 1
        %s988 = scalar_lea.vmem [#allocation10], %s987
        // Predicated region
        $region69: #{tpu_custom_call.1} parent=51 // pred_check
          %p989 = pneg %p225
        $region70: #{tpu_custom_call.1} parent=51 // pred_check_branch
          %991 = sbr.rel (%p989) target = $region72
        $region71: #{tpu_custom_call.1} parent=51 // pred_region
          %s993 = ssub.s32 16, 16
          %994 = vsyncadd %s986, %s993
          %s995 = smul.addr %s29, 16
          %s996 = scalar_lea.hbm %s8, %s995
          %s998 = sshll.u32 %s988, 4
          %s999 = int_to_ptr.vmem [resolvable:$true] %s998
          %1001 = dma.vmem_to_hbm [thread:$0]  %s999, 16, %s996, %s986
        $region72: #{tpu_custom_call.1} parent=51 // pred_fallthru
          _
      $region52: #{tpu_custom_call.1} parent=5 // pred_fallthru
        _
      %p1002 = scmp.le.s32.totalorder 2, %s24
      // Predicated region
      $region73: #{tpu_custom_call.1} parent=5 // pred_check
        %p1003 = pneg %p1002
      $region74: #{tpu_custom_call.1} parent=5 // pred_check_branch
        %1005 = sbr.rel (%p1003) target = $region76
      $region75: #{tpu_custom_call.1} parent=5 // pred_region
        %s1006 = ssub.s32 %s24, 2
        // Predicated region
        $region77: #{tpu_custom_call.1} parent=75 // pred_check
          %p1007 = pneg %p231
        $region78: #{tpu_custom_call.1} parent=75 // pred_check_branch
          %1009 = sbr.rel (%p1007) target = $region80
        $region79: #{tpu_custom_call.1} parent=75 // pred_region
          %s1010 = sand.u32 %s216, 1
          %s1011 = scalar_lea.sflag [#allocation4], %s1010
          %s1012 = sand.u32 %s216, 1
          %s1013 = scalar_lea.vmem [#allocation10], %s1012
          %1014 = dma.done %s1011, 16
        $region80: #{tpu_custom_call.1} parent=75 // pred_fallthru
          _
      $region76: #{tpu_custom_call.1} parent=5 // pred_fallthru
        _
    $region6: #{tpu_custom_call.1} parent=1 // loop_footer
      %s28 = sadd.s32 1, %s24
    $region7: #{tpu_custom_call.1} parent=1 // loop_footer_branch
      %23 = sbr.rel target = $region3
    $region8: #{tpu_custom_call.1} parent=1 // loop_exit
      _
    %1015 = vsyncpa [#allocation3], 1
    %s1016 = scalar_lea.sflag [#allocation3], 1
    %1017 = vsyncpa %s1016, 1
    %1018 = vsyncpa [#allocation6], 1
    %s1019 = scalar_lea.sflag [#allocation6], 1
    %1020 = vsyncpa %s1019, 1
    %1021 = vsyncpa [#allocation9], 1
    %1022 = vsyncpa [#allocation4], 1
    %s1023 = scalar_lea.sflag [#allocation4], 1
    %1024 = vsyncpa %s1023, 1

</llo_original>
